<compile_context>
chip_gen: v7x
topology: tpu7x:2x2x1
jax: 0.10.0
libtpu: 0.0.40
codegen_flags: <defaults>
</compile_context>

<pallas_src>
import numpy as np
import jax
import jax.numpy as jnp
from jax.experimental import pallas as pl
from jax.experimental.pallas import tpu as pltpu

# ----- FreTS hyperparameters (task_name = 'long_term_forecast') -----
EMBED = 128                 # self.embed_size
HIDDEN = 256                # self.hidden_size
SEQ_LEN = 8                 # configs.seq_len  (T)
PRED_LEN = 4                # configs.pred_len
ENC_IN = 4                  # configs.enc_in   (N)
BATCH = 2
CHANNEL_INDEPENDENCE = '0'  # '0' -> run MLP_channel then MLP_temporal
LAMBDA = 0.01               # sparsity_threshold
LEAKY_SLOPE = 0.01          # nn.LeakyReLU default
SCALE = 0.02


def _softshrink(y, lam):
    return jnp.where(y > lam, y - lam, jnp.where(y < -lam, y + lam, jnp.zeros_like(y)))


# ----------------------------------------------------------------------------
# Host-side real-DFT matrices (norm='ortho') and their Kronecker-structured
# "slab" versions.  Applied from the left to an activation slab whose rows
# enumerate (t, b, n) and whose lanes are the embed dim D.
# ----------------------------------------------------------------------------
def _rfft_real_mats(L):
    F = L // 2 + 1
    k = np.arange(F, dtype=np.float64)[:, None]
    l = np.arange(L, dtype=np.float64)[None, :]
    ang = 2.0 * np.pi * k * l / L
    s = 1.0 / np.sqrt(L)
    C = np.cos(ang) * s           # (F, L)   real part of rfft
    S = -np.sin(ang) * s          # (F, L)   imag part of rfft
    mult = np.full((F,), 2.0)
    mult[0] = 1.0
    if L % 2 == 0:
        mult[-1] = 1.0            # Nyquist bin counted once
    Wr = (mult[:, None] * C).T    # (L, F)   irfft coefficient on real part
    Wi = (mult[:, None] * S).T    # (L, F)   irfft coefficient on imag part
    return C, S, Wr, Wi


def _freq_matrices(N, T, B):
    """M1 (channel rfft), M2 (channel irfft fused with temporal rfft), M3 (temporal irfft)."""
    Cc, Sc, Wrc, Wic = _rfft_real_mats(N)      # channel axis, length N
    Ct, St, Wrt, Wit = _rfft_real_mats(T)      # temporal axis, length T
    I_tb = np.eye(T * B)
    I_bn = np.eye(B * N)
    m1 = np.vstack([np.kron(I_tb, Cc), np.kron(I_tb, Sc)])           # (2*T*B*Fc, T*B*N)
    irfft_c = np.hstack([np.kron(I_tb, Wrc), np.kron(I_tb, Wic)])    # (T*B*N, 2*T*B*Fc)
    rfft_t = np.vstack([np.kron(Ct, I_bn), np.kron(St, I_bn)])       # (2*Ft*B*N, T*B*N)
    m2 = rfft_t @ irfft_c                                            # (2*Ft*B*N, 2*T*B*Fc)
    m3 = np.hstack([np.kron(Wrt, I_bn), np.kron(Wit, I_bn)])         # (T*B*N, 2*Ft*B*N)
    # MXU-only operands -> bf16 halves their HBM traffic; accumulation stays
    # f32 in-kernel (explicit upcast + preferred_element_type).
    return (jnp.asarray(m1, jnp.bfloat16),
            jnp.asarray(m2, jnp.bfloat16),
            jnp.asarray(m3, jnp.bfloat16))


# ----------------------------------------------------------------------------
# The single fused kernel:
#   tokenEmb -> channel FreMLP block -> temporal FreMLP block -> residual
#   -> FC head (Linear 1024->256, LeakyReLU, Linear 256->pred)
# ----------------------------------------------------------------------------
def _make_fused_kernel(B, T, N):
    Fc = N // 2 + 1
    Ft = T // 2 + 1
    RC = T * B * Fc         # real rows after the channel rfft
    RT = Ft * B * N         # real rows after the temporal rfft
    G = B * N               # rows per time block (= rows of the FC head input)

    def kernel(xcol_ref, emb_ref, m1_ref, m2_ref, m3_ref, fre_ref,
               w1_hbm, b1_ref, w2_ref, b2_ref, o_ref, w1_vmem, w1_sem):
        # Kick off the dominant (0.5 MiB bf16) w1 DMA immediately so it hides
        # behind the DFT-stage matmuls + FreMLP below.
        w1_copy = pltpu.make_async_copy(w1_hbm, w1_vmem, w1_sem)
        w1_copy.start()

        # ---- tokenEmb (fused): outer product of value column and embedding row ----
        s0 = xcol_ref[...] * emb_ref[...]                 # (T*B*N, D) f32 slab
        fre = fre_ref[...]                                # (8, D): rd1,id1,rb1,ib1,rd2,id2,rb2,ib2

        # ---- MLP_channel: rfft over N (stacked real/imag), FreMLP ----
        z1 = jnp.dot(m1_ref[...].astype(jnp.float32), s0,
                     preferred_element_type=jnp.float32)                     # (2*RC, D)
        xr, xi = z1[:RC], z1[RC:]
        o_r = _softshrink(jnp.maximum(xr * fre[0:1] - xi * fre[1:2] + fre[2:3], 0.0), LAMBDA)
        o_i = _softshrink(jnp.maximum(xi * fre[0:1] + xr * fre[1:2] + fre[3:4], 0.0), LAMBDA)
        o1 = jnp.concatenate([o_r, o_i], axis=0)                             # (2*RC, D)

        # ---- irfft over N fused with rfft over T (single precomputed matrix) ----
        z2 = jnp.dot(m2_ref[...].astype(jnp.float32), o1,
                     preferred_element_type=jnp.float32)                     # (2*RT, D)
        yr, yi = z2[:RT], z2[RT:]
        p_r = _softshrink(jnp.maximum(yr * fre[4:5] - yi * fre[5:6] + fre[6:7], 0.0), LAMBDA)
        p_i = _softshrink(jnp.maximum(yi * fre[4:5] + yr * fre[5:6] + fre[7:8], 0.0), LAMBDA)
        o2 = jnp.concatenate([p_r, p_i], axis=0)                             # (2*RT, D)

        # ---- irfft over T + residual ----
        x = jnp.dot(m3_ref[...].astype(jnp.float32), o2,
                    preferred_element_type=jnp.float32) + s0                 # (T*B*N, D)

        # ---- FC head: relayout (T, B*N, D) -> (B*N, T*D) via lane concat ----
        xf = jnp.concatenate([x[t * G:(t + 1) * G, :] for t in range(T)], axis=1)  # (G, T*D)
        w1_copy.wait()        # w1 landed while the DFT stages were running
        h = jnp.dot(xf, w1_vmem[...].astype(jnp.float32),
                    preferred_element_type=jnp.float32) + b1_ref[...]
        h = jnp.where(h >= 0, h, LEAKY_SLOPE * h)
        o_ref[...] = jnp.dot(h, w2_ref[...], preferred_element_type=jnp.float32) + b2_ref[...]

    return kernel


# ----------------------------------------------------------------------------
# Full FreTS forward (forecast branch)
# ----------------------------------------------------------------------------
def frets_forward(x_enc, params):
    B, T, N = x_enc.shape
    D = EMBED
    Fc = N // 2 + 1
    Ft = T // 2 + 1
    R0 = T * B * N
    R1 = 2 * T * B * Fc
    R2 = 2 * Ft * B * N
    G = B * N
    H = HIDDEN
    P = PRED_LEN

    # Only wrapper-side data prep: the tiny (R0, 1) value column with rows
    # ordered (t, b, n).  The embedded slab itself is built inside the kernel.
    xcol = jnp.transpose(x_enc, (1, 0, 2)).reshape(R0, 1)

    # Precomputed (trace-time numpy) Kronecker DFT matrices, bf16.
    # NOTE: only the channel_independence == '0' path is built (channel + temporal).
    m1, m2, m3 = _freq_matrices(N, T, B)

    kernel = _make_fused_kernel(B, T, N)
    out = pl.pallas_call(
        kernel,
        out_shape=jax.ShapeDtypeStruct((G, P), jnp.float32),
        grid=(1,),
        in_specs=[
            pl.BlockSpec((R0, 1), lambda i: (0, 0)),      # value column
            pl.BlockSpec((1, D), lambda i: (0, 0)),       # embeddings row
            pl.BlockSpec((R1, R0), lambda i: (0, 0)),     # m1 (bf16)
            pl.BlockSpec((R2, R1), lambda i: (0, 0)),     # m2 (bf16)
            pl.BlockSpec((R0, R2), lambda i: (0, 0)),     # m3 (bf16)
            pl.BlockSpec((8, D), lambda i: (0, 0)),       # fre params (diag/bias rows)
            pl.BlockSpec(memory_space=pl.ANY),            # w1 (bf16) - manual DMA
            pl.BlockSpec((1, H), lambda i: (0, 0)),       # b1
            pl.BlockSpec((H, P), lambda i: (0, 0)),       # w2 (full-array block, no padding)
            pl.BlockSpec((1, P), lambda i: (0, 0)),       # b2
        ],
        out_specs=pl.BlockSpec((G, P), lambda i: (0, 0)),
        scratch_shapes=[pltpu.VMEM((T * D, H), jnp.bfloat16),   # w1 landing buffer
                        pltpu.SemaphoreType.DMA(())],
        compiler_params=pltpu.CompilerParams(dimension_semantics=("arbitrary",)),
    )(xcol, params['emb'], m1, m2, m3, params['fre'],
      params['w1bf'], params['b1r'], params['w2'], params['b2r'])

    dec = jnp.transpose(out.reshape(B, N, P), (0, 2, 1))              # (B, P, N)
    return dec[:, -PRED_LEN:, :], 0       # forward() returns (dec_out[..], 0)


# ----------------------------------------------------------------------------
# Pure-JAX reference (uses jnp.fft) to validate the fused Pallas kernel.
# ----------------------------------------------------------------------------
def frets_reference(x_enc, params):
    B, T, N = x_enc.shape
    x = jnp.transpose(x_enc, (0, 2, 1))[..., None] * params['emb']
    bias = x

    def fremlp(xc, r, i, rb, ib):
        rd = jnp.diag(r)
        idg = jnp.diag(i)
        o_r = _softshrink(jax.nn.relu(xc.real * rd - xc.imag * idg + rb), LAMBDA)
        o_i = _softshrink(jax.nn.relu(xc.imag * rd + xc.real * idg + ib), LAMBDA)
        return o_r + 1j * o_i

    if CHANNEL_INDEPENDENCE == '0':
        xc = jnp.transpose(x, (0, 2, 1, 3))
        Yc = fremlp(jnp.fft.rfft(xc, axis=2, norm='ortho'),
                    params['r1'], params['i1'], params['rb1'], params['ib1'])
        xc = jnp.fft.irfft(Yc, n=N, axis=2, norm='ortho')
        x = jnp.transpose(xc, (0, 2, 1, 3))
    Yt = fremlp(jnp.fft.rfft(x, axis=2, norm='ortho'),
                params['r2'], params['i2'], params['rb2'], params['ib2'])
    x = jnp.fft.irfft(Yt, n=T, axis=2, norm='ortho') + bias
    h = x.reshape(B, N, T * EMBED) @ params['w1'] + params['b1']
    h = jnp.where(h >= 0, h, LEAKY_SLOPE * h)
    out = h @ params['w2'] + params['b2']
    return jnp.transpose(out, (0, 2, 1))[:, -PRED_LEN:, :]


def init_params(key):
    D = EMBED
    ks = jax.random.split(key, 13)
    p = {
        'emb': jax.random.normal(ks[0], (1, D), jnp.float32),
        'r1': SCALE * jax.random.normal(ks[1], (D, D), jnp.float32),
        'i1': SCALE * jax.random.normal(ks[2], (D, D), jnp.float32),
        'rb1': SCALE * jax.random.normal(ks[3], (D,), jnp.float32),
        'ib1': SCALE * jax.random.normal(ks[4], (D,), jnp.float32),
        'r2': SCALE * jax.random.normal(ks[5], (D, D), jnp.float32),
        'i2': SCALE * jax.random.normal(ks[6], (D, D), jnp.float32),
        'rb2': SCALE * jax.random.normal(ks[7], (D,), jnp.float32),
        'ib2': SCALE * jax.random.normal(ks[8], (D,), jnp.float32),
    }
    fan_in1 = SEQ_LEN * D
    lim1 = 1.0 / np.sqrt(fan_in1)
    lim2 = 1.0 / np.sqrt(HIDDEN)
    p['w1'] = jax.random.uniform(ks[9], (fan_in1, HIDDEN), jnp.float32, -lim1, lim1)
    p['b1'] = jax.random.uniform(ks[10], (HIDDEN,), jnp.float32, -lim1, lim1)
    p['w2'] = jax.random.uniform(ks[11], (HIDDEN, PRED_LEN), jnp.float32, -lim2, lim2)
    p['b2'] = jax.random.uniform(ks[12], (PRED_LEN,), jnp.float32, -lim2, lim2)

    # Kernel-ready packed/cast parameters (hoisted out of the per-forward path):
    #   row 0..3: diag(r1), diag(i1), rb1, ib1 ; row 4..7: diag(r2), diag(i2), rb2, ib2
    p['fre'] = jnp.stack([jnp.diag(p['r1']), jnp.diag(p['i1']), p['rb1'], p['ib1'],
                          jnp.diag(p['r2']), jnp.diag(p['i2']), p['rb2'], p['ib2']], axis=0)
    p['w1bf'] = p['w1'].astype(jnp.bfloat16)   # MXU-only operand, manually DMA'd
    p['b1r'] = p['b1'].reshape(1, HIDDEN)
    p['b2r'] = p['b2'].reshape(1, PRED_LEN)
    return p


if __name__ == "__main__":
    key = jax.random.PRNGKey(0)
    kx, kp = jax.random.split(key)
    # x_mark_enc / x_dec / x_mark_dec are unused by the forecast branch.
    x_enc = jax.random.normal(kx, (BATCH, SEQ_LEN, ENC_IN), jnp.float32)
    params = init_params(kp)

    dec_out, zero = jax.jit(frets_forward)(x_enc, params)
    dec_out = jax.block_until_ready(dec_out)
    assert dec_out.shape == (BATCH, PRED_LEN, ENC_IN)

    ref = frets_reference(x_enc, params)
    err = float(jnp.max(jnp.abs(dec_out - ref)))
    # bf16 storage of w1 / DFT matrices (f32 accumulation) -> tolerance 3e-3
    # per the perf-review numerics note.
    assert err < 3e-3, f"kernel/reference mismatch: max abs err = {err}"
    print("KERNEL_OK")
</pallas_src>

<mosaic_0001>
module attributes {stable_mosaic.version = 11 : i64} {
  func.func @kernel(%arg0: i32, %arg1: memref<64x1xf32, #tpu.memory_space<vmem>>, %arg2: memref<1x128xf32, #tpu.memory_space<vmem>>, %arg3: memref<96x64xbf16, #tpu.memory_space<vmem>>, %arg4: memref<80x96xbf16, #tpu.memory_space<vmem>>, %arg5: memref<64x80xbf16, #tpu.memory_space<vmem>>, %arg6: memref<8x128xf32, #tpu.memory_space<vmem>>, %arg7: memref<1024x256xbf16, #tpu.memory_space<any>>, %arg8: memref<1x256xf32, #tpu.memory_space<vmem>>, %arg9: memref<256x4xf32, #tpu.memory_space<vmem>>, %arg10: memref<1x4xf32, #tpu.memory_space<vmem>>, %arg11: memref<8x4xf32, #tpu.memory_space<vmem>>, %arg12: memref<1024x256xbf16, #tpu.memory_space<vmem>>, %arg13: memref<!tpu.dma_semaphore, #tpu.memory_space<semaphore_mem>>) attributes {dimension_semantics = [#tpu.dimension_semantics<arbitrary>], iteration_bounds = array<i64: 1>, scalar_prefetch = 0 : i64, scratch_operands = 2 : i64, tpu.core_type = #tpu.core_type<tc>, window_params = [{pipeline_mode = #tpu.pipeline_mode<synchronous>, transform_indices = @transform_0, window_bounds = array<i64: 64, 1>}, {pipeline_mode = #tpu.pipeline_mode<synchronous>, transform_indices = @transform_1, window_bounds = array<i64: 1, 128>}, {pipeline_mode = #tpu.pipeline_mode<synchronous>, transform_indices = @transform_2, window_bounds = array<i64: 96, 64>}, {pipeline_mode = #tpu.pipeline_mode<synchronous>, transform_indices = @transform_3, window_bounds = array<i64: 80, 96>}, {pipeline_mode = #tpu.pipeline_mode<synchronous>, transform_indices = @transform_4, window_bounds = array<i64: 64, 80>}, {pipeline_mode = #tpu.pipeline_mode<synchronous>, transform_indices = @transform_5, window_bounds = array<i64: 8, 128>}, {}, {pipeline_mode = #tpu.pipeline_mode<synchronous>, transform_indices = @transform_7, window_bounds = array<i64: 1, 256>}, {pipeline_mode = #tpu.pipeline_mode<synchronous>, transform_indices = @transform_8, window_bounds = array<i64: 256, 4>}, {pipeline_mode = #tpu.pipeline_mode<synchronous>, transform_indices = @transform_9, window_bounds = array<i64: 1, 4>}, {pipeline_mode = #tpu.pipeline_mode<synchronous>, transform_indices = @transform_10, window_bounds = array<i64: 8, 4>}]} {
    tpu.enqueue_dma source(%arg7 : memref<1024x256xbf16, #tpu.memory_space<any>>) target(%arg12 : memref<1024x256xbf16, #tpu.memory_space<vmem>>) target_semaphore(%arg13 : memref<!tpu.dma_semaphore, #tpu.memory_space<semaphore_mem>>)
    %c0 = arith.constant 0 : index
    %c0_0 = arith.constant 0 : index
    %0 = vector.load %arg1[%c0, %c0_0] : memref<64x1xf32, #tpu.memory_space<vmem>>, vector<64x1xf32>
    %c0_1 = arith.constant 0 : index
    %c0_2 = arith.constant 0 : index
    %1 = vector.load %arg2[%c0_1, %c0_2] : memref<1x128xf32, #tpu.memory_space<vmem>>, vector<1x128xf32>
    %2 = vector.broadcast %0 : vector<64x1xf32> to vector<64x128xf32>
    %3 = vector.broadcast %1 : vector<1x128xf32> to vector<64x128xf32>
    %4 = arith.mulf %2, %3 : vector<64x128xf32>
    %c0_3 = arith.constant 0 : index
    %c0_4 = arith.constant 0 : index
    %5 = vector.load %arg6[%c0_3, %c0_4] : memref<8x128xf32, #tpu.memory_space<vmem>>, vector<8x128xf32>
    %c0_5 = arith.constant 0 : index
    %c0_6 = arith.constant 0 : index
    %6 = vector.load %arg3[%c0_5, %c0_6] : memref<96x64xbf16, #tpu.memory_space<vmem>>, vector<96x64xbf16>
    %7 = arith.extf %6 : vector<96x64xbf16> to vector<96x64xf32>
    %cst = arith.constant dense<0.000000e+00> : vector<96x128xf32>
    %8 = tpu.matmul %7, %4, %cst {dimension_numbers = #tpu.dot_dimension_numbers<[1], [0], [0], [1], [0, 0, 1, 1], [], []>} : vector<96x64xf32>, vector<64x128xf32>, vector<96x128xf32> -> vector<96x128xf32>
    %9 = vector.extract_strided_slice %8 {offsets = [0, 0], sizes = [48, 128], strides = [1, 1]} : vector<96x128xf32> to vector<48x128xf32>
    %10 = vector.extract_strided_slice %8 {offsets = [48, 0], sizes = [48, 128], strides = [1, 1]} : vector<96x128xf32> to vector<48x128xf32>
    %11 = vector.extract_strided_slice %5 {offsets = [0, 0], sizes = [1, 128], strides = [1, 1]} : vector<8x128xf32> to vector<1x128xf32>
    %12 = vector.broadcast %11 : vector<1x128xf32> to vector<48x128xf32>
    %13 = arith.mulf %9, %12 : vector<48x128xf32>
    %14 = vector.extract_strided_slice %5 {offsets = [1, 0], sizes = [1, 128], strides = [1, 1]} : vector<8x128xf32> to vector<1x128xf32>
    %15 = vector.broadcast %14 : vector<1x128xf32> to vector<48x128xf32>
    %16 = arith.mulf %10, %15 : vector<48x128xf32>
    %17 = arith.subf %13, %16 : vector<48x128xf32>
    %18 = vector.extract_strided_slice %5 {offsets = [2, 0], sizes = [1, 128], strides = [1, 1]} : vector<8x128xf32> to vector<1x128xf32>
    %19 = vector.broadcast %18 : vector<1x128xf32> to vector<48x128xf32>
    %20 = arith.addf %17, %19 : vector<48x128xf32>
    %cst_7 = arith.constant 0.000000e+00 : f32
    %21 = vector.broadcast %cst_7 : f32 to vector<48x128xf32>
    %22 = arith.maximumf %20, %21 : vector<48x128xf32>
    %cst_8 = arith.constant 0.00999999977 : f32
    %23 = vector.broadcast %cst_8 : f32 to vector<48x128xf32>
    %24 = arith.cmpf ogt, %22, %23 : vector<48x128xf32>
    %cst_9 = arith.constant 0.00999999977 : f32
    %25 = vector.broadcast %cst_9 : f32 to vector<48x128xf32>
    %26 = arith.subf %22, %25 : vector<48x128xf32>
    %cst_10 = arith.constant -0.00999999977 : f32
    %27 = vector.broadcast %cst_10 : f32 to vector<48x128xf32>
    %28 = arith.cmpf olt, %22, %27 : vector<48x128xf32>
    %cst_11 = arith.constant 0.00999999977 : f32
    %29 = vector.broadcast %cst_11 : f32 to vector<48x128xf32>
    %30 = arith.addf %22, %29 : vector<48x128xf32>
    %cst_12 = arith.constant 0.000000e+00 : f32
    %31 = vector.broadcast %cst_12 : f32 to vector<48x128xf32>
    %32 = arith.select %28, %30, %31 : vector<48x128xi1>, vector<48x128xf32>
    %33 = arith.select %24, %26, %32 : vector<48x128xi1>, vector<48x128xf32>
    %34 = vector.extract_strided_slice %5 {offsets = [0, 0], sizes = [1, 128], strides = [1, 1]} : vector<8x128xf32> to vector<1x128xf32>
    %35 = vector.broadcast %34 : vector<1x128xf32> to vector<48x128xf32>
    %36 = arith.mulf %10, %35 : vector<48x128xf32>
    %37 = vector.extract_strided_slice %5 {offsets = [1, 0], sizes = [1, 128], strides = [1, 1]} : vector<8x128xf32> to vector<1x128xf32>
    %38 = vector.broadcast %37 : vector<1x128xf32> to vector<48x128xf32>
    %39 = arith.mulf %9, %38 : vector<48x128xf32>
    %40 = arith.addf %36, %39 : vector<48x128xf32>
    %41 = vector.extract_strided_slice %5 {offsets = [3, 0], sizes = [1, 128], strides = [1, 1]} : vector<8x128xf32> to vector<1x128xf32>
    %42 = vector.broadcast %41 : vector<1x128xf32> to vector<48x128xf32>
    %43 = arith.addf %40, %42 : vector<48x128xf32>
    %cst_13 = arith.constant 0.000000e+00 : f32
    %44 = vector.broadcast %cst_13 : f32 to vector<48x128xf32>
    %45 = arith.maximumf %43, %44 : vector<48x128xf32>
    %cst_14 = arith.constant 0.00999999977 : f32
    %46 = vector.broadcast %cst_14 : f32 to vector<48x128xf32>
    %47 = arith.cmpf ogt, %45, %46 : vector<48x128xf32>
    %cst_15 = arith.constant 0.00999999977 : f32
    %48 = vector.broadcast %cst_15 : f32 to vector<48x128xf32>
    %49 = arith.subf %45, %48 : vector<48x128xf32>
    %cst_16 = arith.constant -0.00999999977 : f32
    %50 = vector.broadcast %cst_16 : f32 to vector<48x128xf32>
    %51 = arith.cmpf olt, %45, %50 : vector<48x128xf32>
    %cst_17 = arith.constant 0.00999999977 : f32
    %52 = vector.broadcast %cst_17 : f32 to vector<48x128xf32>
    %53 = arith.addf %45, %52 : vector<48x128xf32>
    %cst_18 = arith.constant 0.000000e+00 : f32
    %54 = vector.broadcast %cst_18 : f32 to vector<48x128xf32>
    %55 = arith.select %51, %53, %54 : vector<48x128xi1>, vector<48x128xf32>
    %56 = arith.select %47, %49, %55 : vector<48x128xi1>, vector<48x128xf32>
    %57 = tpu.concatenate %33, %56 in 0 : vector<48x128xf32>, vector<48x128xf32> -> vector<96x128xf32>
    %c0_19 = arith.constant 0 : index
    %c0_20 = arith.constant 0 : index
    %58 = vector.load %arg4[%c0_19, %c0_20] : memref<80x96xbf16, #tpu.memory_space<vmem>>, vector<80x96xbf16>
    %59 = arith.extf %58 : vector<80x96xbf16> to vector<80x96xf32>
    %cst_21 = arith.constant dense<0.000000e+00> : vector<80x128xf32>
    %60 = tpu.matmul %59, %57, %cst_21 {dimension_numbers = #tpu.dot_dimension_numbers<[1], [0], [0], [1], [0, 0, 1, 1], [], []>} : vector<80x96xf32>, vector<96x128xf32>, vector<80x128xf32> -> vector<80x128xf32>
    %61 = vector.extract_strided_slice %60 {offsets = [0, 0], sizes = [40, 128], strides = [1, 1]} : vector<80x128xf32> to vector<40x128xf32>
    %62 = vector.extract_strided_slice %60 {offsets = [40, 0], sizes = [40, 128], strides = [1, 1]} : vector<80x128xf32> to vector<40x128xf32>
    %63 = vector.extract_strided_slice %5 {offsets = [4, 0], sizes = [1, 128], strides = [1, 1]} : vector<8x128xf32> to vector<1x128xf32>
    %64 = vector.broadcast %63 : vector<1x128xf32> to vector<40x128xf32>
    %65 = arith.mulf %61, %64 : vector<40x128xf32>
    %66 = vector.extract_strided_slice %5 {offsets = [5, 0], sizes = [1, 128], strides = [1, 1]} : vector<8x128xf32> to vector<1x128xf32>
    %67 = vector.broadcast %66 : vector<1x128xf32> to vector<40x128xf32>
    %68 = arith.mulf %62, %67 : vector<40x128xf32>
    %69 = arith.subf %65, %68 : vector<40x128xf32>
    %70 = vector.extract_strided_slice %5 {offsets = [6, 0], sizes = [1, 128], strides = [1, 1]} : vector<8x128xf32> to vector<1x128xf32>
    %71 = vector.broadcast %70 : vector<1x128xf32> to vector<40x128xf32>
    %72 = arith.addf %69, %71 : vector<40x128xf32>
    %cst_22 = arith.constant 0.000000e+00 : f32
    %73 = vector.broadcast %cst_22 : f32 to vector<40x128xf32>
    %74 = arith.maximumf %72, %73 : vector<40x128xf32>
    %cst_23 = arith.constant 0.00999999977 : f32
    %75 = vector.broadcast %cst_23 : f32 to vector<40x128xf32>
    %76 = arith.cmpf ogt, %74, %75 : vector<40x128xf32>
    %cst_24 = arith.constant 0.00999999977 : f32
    %77 = vector.broadcast %cst_24 : f32 to vector<40x128xf32>
    %78 = arith.subf %74, %77 : vector<40x128xf32>
    %cst_25 = arith.constant -0.00999999977 : f32
    %79 = vector.broadcast %cst_25 : f32 to vector<40x128xf32>
    %80 = arith.cmpf olt, %74, %79 : vector<40x128xf32>
    %cst_26 = arith.constant 0.00999999977 : f32
    %81 = vector.broadcast %cst_26 : f32 to vector<40x128xf32>
    %82 = arith.addf %74, %81 : vector<40x128xf32>
    %cst_27 = arith.constant 0.000000e+00 : f32
    %83 = vector.broadcast %cst_27 : f32 to vector<40x128xf32>
    %84 = arith.select %80, %82, %83 : vector<40x128xi1>, vector<40x128xf32>
    %85 = arith.select %76, %78, %84 : vector<40x128xi1>, vector<40x128xf32>
    %86 = vector.extract_strided_slice %5 {offsets = [4, 0], sizes = [1, 128], strides = [1, 1]} : vector<8x128xf32> to vector<1x128xf32>
    %87 = vector.broadcast %86 : vector<1x128xf32> to vector<40x128xf32>
    %88 = arith.mulf %62, %87 : vector<40x128xf32>
    %89 = vector.extract_strided_slice %5 {offsets = [5, 0], sizes = [1, 128], strides = [1, 1]} : vector<8x128xf32> to vector<1x128xf32>
    %90 = vector.broadcast %89 : vector<1x128xf32> to vector<40x128xf32>
    %91 = arith.mulf %61, %90 : vector<40x128xf32>
    %92 = arith.addf %88, %91 : vector<40x128xf32>
    %93 = vector.extract_strided_slice %5 {offsets = [7, 0], sizes = [1, 128], strides = [1, 1]} : vector<8x128xf32> to vector<1x128xf32>
    %94 = vector.broadcast %93 : vector<1x128xf32> to vector<40x128xf32>
    %95 = arith.addf %92, %94 : vector<40x128xf32>
    %cst_28 = arith.constant 0.000000e+00 : f32
    %96 = vector.broadcast %cst_28 : f32 to vector<40x128xf32>
    %97 = arith.maximumf %95, %96 : vector<40x128xf32>
    %cst_29 = arith.constant 0.00999999977 : f32
    %98 = vector.broadcast %cst_29 : f32 to vector<40x128xf32>
    %99 = arith.cmpf ogt, %97, %98 : vector<40x128xf32>
    %cst_30 = arith.constant 0.00999999977 : f32
    %100 = vector.broadcast %cst_30 : f32 to vector<40x128xf32>
    %101 = arith.subf %97, %100 : vector<40x128xf32>
    %cst_31 = arith.constant -0.00999999977 : f32
    %102 = vector.broadcast %cst_31 : f32 to vector<40x128xf32>
    %103 = arith.cmpf olt, %97, %102 : vector<40x128xf32>
    %cst_32 = arith.constant 0.00999999977 : f32
    %104 = vector.broadcast %cst_32 : f32 to vector<40x128xf32>
    %105 = arith.addf %97, %104 : vector<40x128xf32>
    %cst_33 = arith.constant 0.000000e+00 : f32
    %106 = vector.broadcast %cst_33 : f32 to vector<40x128xf32>
    %107 = arith.select %103, %105, %106 : vector<40x128xi1>, vector<40x128xf32>
    %108 = arith.select %99, %101, %107 : vector<40x128xi1>, vector<40x128xf32>
    %109 = tpu.concatenate %85, %108 in 0 : vector<40x128xf32>, vector<40x128xf32> -> vector<80x128xf32>
    %c0_34 = arith.constant 0 : index
    %c0_35 = arith.constant 0 : index
    %110 = vector.load %arg5[%c0_34, %c0_35] : memref<64x80xbf16, #tpu.memory_space<vmem>>, vector<64x80xbf16>
    %111 = arith.extf %110 : vector<64x80xbf16> to vector<64x80xf32>
    %cst_36 = arith.constant dense<0.000000e+00> : vector<64x128xf32>
    %112 = tpu.matmul %111, %109, %cst_36 {dimension_numbers = #tpu.dot_dimension_numbers<[1], [0], [0], [1], [0, 0, 1, 1], [], []>} : vector<64x80xf32>, vector<80x128xf32>, vector<64x128xf32> -> vector<64x128xf32>
    %113 = arith.addf %112, %4 : vector<64x128xf32>
    %114 = vector.extract_strided_slice %113 {offsets = [0, 0], sizes = [8, 128], strides = [1, 1]} : vector<64x128xf32> to vector<8x128xf32>
    %115 = vector.extract_strided_slice %113 {offsets = [8, 0], sizes = [8, 128], strides = [1, 1]} : vector<64x128xf32> to vector<8x128xf32>
    %116 = vector.extract_strided_slice %113 {offsets = [16, 0], sizes = [8, 128], strides = [1, 1]} : vector<64x128xf32> to vector<8x128xf32>
    %117 = vector.extract_strided_slice %113 {offsets = [24, 0], sizes = [8, 128], strides = [1, 1]} : vector<64x128xf32> to vector<8x128xf32>
    %118 = vector.extract_strided_slice %113 {offsets = [32, 0], sizes = [8, 128], strides = [1, 1]} : vector<64x128xf32> to vector<8x128xf32>
    %119 = vector.extract_strided_slice %113 {offsets = [40, 0], sizes = [8, 128], strides = [1, 1]} : vector<64x128xf32> to vector<8x128xf32>
    %120 = vector.extract_strided_slice %113 {offsets = [48, 0], sizes = [8, 128], strides = [1, 1]} : vector<64x128xf32> to vector<8x128xf32>
    %121 = vector.extract_strided_slice %113 {offsets = [56, 0], sizes = [8, 128], strides = [1, 1]} : vector<64x128xf32> to vector<8x128xf32>
    %122 = tpu.concatenate %114, %115, %116, %117, %118, %119, %120, %121 in 1 : vector<8x128xf32>, vector<8x128xf32>, vector<8x128xf32>, vector<8x128xf32>, vector<8x128xf32>, vector<8x128xf32>, vector<8x128xf32>, vector<8x128xf32> -> vector<8x1024xf32>
    tpu.wait_dma2 semaphore(%arg13 : memref<!tpu.dma_semaphore, #tpu.memory_space<semaphore_mem>>) src(%arg7 : memref<1024x256xbf16, #tpu.memory_space<any>>) dst(%arg12 : memref<1024x256xbf16, #tpu.memory_space<vmem>>)
    %c0_37 = arith.constant 0 : index
    %c0_38 = arith.constant 0 : index
    %123 = vector.load %arg12[%c0_37, %c0_38] : memref<1024x256xbf16, #tpu.memory_space<vmem>>, vector<1024x256xbf16>
    %124 = arith.extf %123 : vector<1024x256xbf16> to vector<1024x256xf32>
    %cst_39 = arith.constant dense<0.000000e+00> : vector<8x256xf32>
    %125 = tpu.matmul %122, %124, %cst_39 {dimension_numbers = #tpu.dot_dimension_numbers<[1], [0], [0], [1], [0, 0, 1, 1], [], []>} : vector<8x1024xf32>, vector<1024x256xf32>, vector<8x256xf32> -> vector<8x256xf32>
    %c0_40 = arith.constant 0 : index
    %c0_41 = arith.constant 0 : index
    %126 = vector.load %arg8[%c0_40, %c0_41] : memref<1x256xf32, #tpu.memory_space<vmem>>, vector<1x256xf32>
    %127 = vector.broadcast %126 : vector<1x256xf32> to vector<8x256xf32>
    %128 = arith.addf %125, %127 : vector<8x256xf32>
    %cst_42 = arith.constant 0.000000e+00 : f32
    %129 = vector.broadcast %cst_42 : f32 to vector<8x256xf32>
    %130 = arith.cmpf oge, %128, %129 : vector<8x256xf32>
    %cst_43 = arith.constant 0.00999999977 : f32
    %131 = vector.broadcast %cst_43 : f32 to vector<8x256xf32>
    %132 = arith.mulf %131, %128 : vector<8x256xf32>
    %133 = arith.select %130, %128, %132 : vector<8x256xi1>, vector<8x256xf32>
    %c0_44 = arith.constant 0 : index
    %c0_45 = arith.constant 0 : index
    %134 = vector.load %arg9[%c0_44, %c0_45] : memref<256x4xf32, #tpu.memory_space<vmem>>, vector<256x4xf32>
    %cst_46 = arith.constant dense<0.000000e+00> : vector<8x4xf32>
    %135 = tpu.matmul %133, %134, %cst_46 {dimension_numbers = #tpu.dot_dimension_numbers<[1], [0], [0], [1], [0, 0, 1, 1], [], []>} : vector<8x256xf32>, vector<256x4xf32>, vector<8x4xf32> -> vector<8x4xf32>
    %c0_47 = arith.constant 0 : index
    %c0_48 = arith.constant 0 : index
    %136 = vector.load %arg10[%c0_47, %c0_48] : memref<1x4xf32, #tpu.memory_space<vmem>>, vector<1x4xf32>
    %137 = vector.broadcast %136 : vector<1x4xf32> to vector<8x4xf32>
    %138 = arith.addf %135, %137 : vector<8x4xf32>
    %c0_49 = arith.constant 0 : index
    %c0_50 = arith.constant 0 : index
    %139 = vector.load %arg11[%c0_49, %c0_50] : memref<8x4xf32, #tpu.memory_space<vmem>>, vector<8x4xf32>
    tpu.vector_store %arg11[%c0_49, %c0_50], %138 {strides = array<i32>} : memref<8x4xf32, #tpu.memory_space<vmem>>, vector<8x4xf32>,
    return
  }
  func.func @transform_0(%arg0: i32) -> (i32, i32) {
    %c0_i32 = arith.constant 0 : i32
    %c0_i32_0 = arith.constant 0 : i32
    %c0_i32_1 = arith.constant 0 : i32
    return %c0_i32, %c0_i32_0 : i32, i32
  }
  func.func @transform_1(%arg0: i32) -> (i32, i32) {
    %c0_i32 = arith.constant 0 : i32
    %c0_i32_0 = arith.constant 0 : i32
    %c0_i32_1 = arith.constant 0 : i32
    return %c0_i32, %c0_i32_0 : i32, i32
  }
  func.func @transform_2(%arg0: i32) -> (i32, i32) {
    %c0_i32 = arith.constant 0 : i32
    %c0_i32_0 = arith.constant 0 : i32
    %c0_i32_1 = arith.constant 0 : i32
    return %c0_i32, %c0_i32_0 : i32, i32
  }
  func.func @transform_3(%arg0: i32) -> (i32, i32) {
    %c0_i32 = arith.constant 0 : i32
    %c0_i32_0 = arith.constant 0 : i32
    %c0_i32_1 = arith.constant 0 : i32
    return %c0_i32, %c0_i32_0 : i32, i32
  }
  func.func @transform_4(%arg0: i32) -> (i32, i32) {
    %c0_i32 = arith.constant 0 : i32
    %c0_i32_0 = arith.constant 0 : i32
    %c0_i32_1 = arith.constant 0 : i32
    return %c0_i32, %c0_i32_0 : i32, i32
  }
  func.func @transform_5(%arg0: i32) -> (i32, i32) {
    %c0_i32 = arith.constant 0 : i32
    %c0_i32_0 = arith.constant 0 : i32
    %c0_i32_1 = arith.constant 0 : i32
    return %c0_i32, %c0_i32_0 : i32, i32
  }
  func.func @transform_7(%arg0: i32) -> (i32, i32) {
    %c0_i32 = arith.constant 0 : i32
    %c0_i32_0 = arith.constant 0 : i32
    %c0_i32_1 = arith.constant 0 : i32
    return %c0_i32, %c0_i32_0 : i32, i32
  }
  func.func @transform_8(%arg0: i32) -> (i32, i32) {
    %c0_i32 = arith.constant 0 : i32
    %c0_i32_0 = arith.constant 0 : i32
    %c0_i32_1 = arith.constant 0 : i32
    return %c0_i32, %c0_i32_0 : i32, i32
  }
  func.func @transform_9(%arg0: i32) -> (i32, i32) {
    %c0_i32 = arith.constant 0 : i32
    %c0_i32_0 = arith.constant 0 : i32
    %c0_i32_1 = arith.constant 0 : i32
    return %c0_i32, %c0_i32_0 : i32, i32
  }
  func.func @transform_10(%arg0: i32) -> (i32, i32) {
    %c0_i32 = arith.constant 0 : i32
    %c0_i32_0 = arith.constant 0 : i32
    %c0_i32_1 = arith.constant 0 : i32
    return %c0_i32, %c0_i32_0 : i32, i32
  }
}

</mosaic_0001>

<llo_original>
// kernel: frets_forward.1
$region0: #{frets_forward.1}
  #allocation0 [shape = 'u32[]', space=smem, size = 0x4, offset = 0x4, fixed_abs, tag = 'smem constant byte address 0x4 - core index']
  #allocation1 [shape = 'u32[144,128]{1,0:T(1,128)}', space=vmem, size = 0x12000, scoped, tag = 'internal scratch']
  #allocation2 [shape = 'bf16[1024,256]{1,0:T(16,128)(2,1)}', space=vmem, size = 0x80000, scoped, tag = 'scratch operand']
  #allocation3 [shape = 's32[1]{0}', space=sflag, size = 0x4, scoped, tag = 'scratch operand']
  #allocation4 [shape = 's32[]', space=sflag, size = 0x4, offset = 0, fixed_abs, tag = 'sflag constant byte address 0x0 - dummy sync flag']
  %s0 = inlined_call_operand.vmem [shape: f32[64,1], index: 0, kind: input, shape index: {}]
  %s1 = inlined_call_operand.vmem [shape: f32[1,128], index: 1, kind: input, shape index: {}]
  %s2 = inlined_call_operand.vmem [shape: bf16[96,64], index: 2, kind: input, shape index: {}]
  %s3 = inlined_call_operand.vmem [shape: bf16[80,96], index: 3, kind: input, shape index: {}]
  %s4 = inlined_call_operand.vmem [shape: bf16[64,80], index: 4, kind: input, shape index: {}]
  %s5 = inlined_call_operand.vmem [shape: f32[8,128], index: 5, kind: input, shape index: {}]
  %s6 = inlined_call_operand.hbm [shape: bf16[1024,256], index: 6, kind: input, shape index: {}]
  %s7 = inlined_call_operand.vmem [shape: f32[1,256], index: 7, kind: input, shape index: {}]
  %s8 = inlined_call_operand.vmem [shape: f32[256,4], index: 8, kind: input, shape index: {}]
  %s9 = inlined_call_operand.vmem [shape: f32[1,4], index: 9, kind: input, shape index: {}]
  %s10 = inlined_call_operand.vmem [shape: f32[8,4], index: 10, kind: output, shape index: {}]
  %s11 = sld [smem:[#allocation0]]
  $region46: #{frets_forward.1} parent=0
    _
  %s13 = ssub.s32 1, %s11
  %s14 = scalar_select 0, %s13, %s11
  $region1: #{frets_forward.1} parent=0
    #allocation5 [shape = 'u32[9]{0}', space=smem, size = 0x24, scoped, tag = 'DMA stride descriptor']
    // Predicated region
    $region2: #{frets_forward.1} parent=1 // pred_check
      _
    $region3: #{frets_forward.1} parent=1 // pred_check_branch
      %16 = sbr.rel (0) target = $region5
    $region4: #{frets_forward.1} parent=1 // pred_region
      _
    $region5: #{frets_forward.1} parent=1 // pred_fallthru
      _
    // Predicated region
    $region6: #{frets_forward.1} parent=1 // pred_check
      _
    $region7: #{frets_forward.1} parent=1 // pred_check_branch
      %18 = sbr.rel (0) target = $region9
    $region8: #{frets_forward.1} parent=1 // pred_region
      _
    $region9: #{frets_forward.1} parent=1 // pred_fallthru
      _
    // Predicated region
    $region10: #{frets_forward.1} parent=1 // pred_check
      _
    $region11: #{frets_forward.1} parent=1 // pred_check_branch
      %20 = sbr.rel (0) target = $region13
    $region12: #{frets_forward.1} parent=1 // pred_region
      _
    $region13: #{frets_forward.1} parent=1 // pred_fallthru
      _
    // Predicated region
    $region14: #{frets_forward.1} parent=1 // pred_check
      _
    $region15: #{frets_forward.1} parent=1 // pred_check_branch
      %22 = sbr.rel (0) target = $region17
    $region16: #{frets_forward.1} parent=1 // pred_region
      _
    $region17: #{frets_forward.1} parent=1 // pred_fallthru
      _
    // Predicated region
    $region18: #{frets_forward.1} parent=1 // pred_check
      _
    $region19: #{frets_forward.1} parent=1 // pred_check_branch
      %24 = sbr.rel (0) target = $region21
    $region20: #{frets_forward.1} parent=1 // pred_region
      _
    $region21: #{frets_forward.1} parent=1 // pred_fallthru
      _
    // Predicated region
    $region22: #{frets_forward.1} parent=1 // pred_check
      _
    $region23: #{frets_forward.1} parent=1 // pred_check_branch
      %26 = sbr.rel (0) target = $region25
    $region24: #{frets_forward.1} parent=1 // pred_region
      _
    $region25: #{frets_forward.1} parent=1 // pred_fallthru
      _
    // Predicated region
    $region26: #{frets_forward.1} parent=1 // pred_check
      _
    $region27: #{frets_forward.1} parent=1 // pred_check_branch
      %28 = sbr.rel (0) target = $region29
    $region28: #{frets_forward.1} parent=1 // pred_region
      _
    $region29: #{frets_forward.1} parent=1 // pred_fallthru
      _
    // Predicated region
    $region30: #{frets_forward.1} parent=1 // pred_check
      _
    $region31: #{frets_forward.1} parent=1 // pred_check_branch
      %30 = sbr.rel (0) target = $region33
    $region32: #{frets_forward.1} parent=1 // pred_region
      _
    $region33: #{frets_forward.1} parent=1 // pred_fallthru
      _
    // Predicated region
    $region34: #{frets_forward.1} parent=1 // pred_check
      _
    $region35: #{frets_forward.1} parent=1 // pred_check_branch
      %32 = sbr.rel (0) target = $region37
    $region36: #{frets_forward.1} parent=1 // pred_region
      _
    $region37: #{frets_forward.1} parent=1 // pred_fallthru
      _
    %s34 = sshll.u32 1, 14
    %s35 = sxor.u32 4294967295, %s34
    %s37 = sld [smem:[#allocation0]]
    %s38 = sadd.s32 2, %s37
    %s40 = sshll.u32 7, 26
    %s41 = sxor.u32 4294967295, %s40
    %s42 = sand.u32 0, %s41
    %s43 = sshll.u32 %s38, 26
    %s44 = sor.u32 %s42, %s43
    %s45 = sshll.u32 [#allocation2], 4
    %s46 = int_to_ptr.vmem [resolvable:$true] %s45
    %49 = sst [smem:[#allocation5]] 256
    %s50 = scalar_lea.smem [#allocation5], 1
    %51 = sst [smem:[%s50]] 256
    %s52 = scalar_lea.smem [#allocation5], 2
    %53 = sst [smem:[%s52]] 2
    %s54 = scalar_lea.smem [#allocation5], 3
    %55 = sst [smem:[%s54]] 64
    %s56 = scalar_lea.smem [#allocation5], 4
    %57 = sst [smem:[%s56]] 128
    %s58 = scalar_lea.smem [#allocation5], 5
    %59 = sst [smem:[%s58]] 2
    %s60 = scalar_lea.smem [#allocation5], 6
    %61 = sst [smem:[%s60]] 128
    %s62 = scalar_lea.smem [#allocation5], 7
    %63 = sst [smem:[%s62]] 64
    %s64 = scalar_lea.smem [#allocation5], 8
    %65 = sst [smem:[%s64]] 4
    %67 = dma.general %s6, 16384, %s46, [#allocation3], [#allocation4], [#allocation5], %s44, 0
    %v68 = vld [vmem:[%s0] sm:$0xff]
    %v69 = vld [vmem:[%s0 + $0x8] sm:$0xff]
    %v70 = vld [vmem:[%s0 + $0x10] sm:$0xff]
    %v71 = vld [vmem:[%s0 + $0x18] sm:$0xff]
    %v72 = vld [vmem:[%s0 + $0x20] sm:$0xff]
    %v73 = vld [vmem:[%s0 + $0x28] sm:$0xff]
    %v74 = vld [vmem:[%s0 + $0x30] sm:$0xff]
    %v75 = vld [vmem:[%s0 + $0x38] sm:$0xff]
    %v76 = vld [vmem:[%s1] sm:$0x1]
    %78 = vset.pattern.permute.xlu0 0
    %79 = vperm.xlu0 %78, %v68
    %v80 = vpop.permute.xlu0 %79
    %83 = vset.pattern.permute.xlu0 0
    %84 = vperm.xlu0 %83, %v69
    %v85 = vpop.permute.xlu0 %84
    %88 = vset.pattern.permute.xlu0 0
    %89 = vperm.xlu0 %88, %v70
    %v90 = vpop.permute.xlu0 %89
    %93 = vset.pattern.permute.xlu0 0
    %94 = vperm.xlu0 %93, %v71
    %v95 = vpop.permute.xlu0 %94
    %98 = vset.pattern.permute.xlu0 0
    %99 = vperm.xlu0 %98, %v72
    %v100 = vpop.permute.xlu0 %99
    %103 = vset.pattern.permute.xlu0 0
    %104 = vperm.xlu0 %103, %v73
    %v105 = vpop.permute.xlu0 %104
    %108 = vset.pattern.permute.xlu0 0
    %109 = vperm.xlu0 %108, %v74
    %v110 = vpop.permute.xlu0 %109
    %113 = vset.pattern.permute.xlu0 0
    %114 = vperm.xlu0 %113, %v75
    %v115 = vpop.permute.xlu0 %114
    %v118 = vlaneseq
    %v119 = vshrl.u32 %v118, 7
    %v120 = vsub.s32 0, %v119
    %v121 = vrot.slane %v76, %v120
    %v123 = vmul.f32 %v80, %v121
    %v124 = vmul.f32 %v85, %v121
    %v125 = vmul.f32 %v90, %v121
    %v126 = vmul.f32 %v95, %v121
    %v127 = vmul.f32 %v100, %v121
    %v128 = vmul.f32 %v105, %v121
    %v129 = vmul.f32 %v110, %v121
    %v130 = vmul.f32 %v115, %v121
    %v131 = vld [vmem:[%s5] sm:$0xff]
    %v132 = vld [vmem:[%s2] sm:$0xf]
    %v133 = vld [vmem:[%s2 + $0x4] sm:$0xf]
    %v134 = vld [vmem:[%s2 + $0x8] sm:$0xf]
    %v135 = vld [vmem:[%s2 + $0xc] sm:$0xf]
    %v136 = vld [vmem:[%s2 + $0x10] sm:$0xf]
    %v137 = vld [vmem:[%s2 + $0x14] sm:$0xf]
    %v138 = vld [vmem:[%s2 + $0x18] sm:$0xf]
    %v139 = vld [vmem:[%s2 + $0x1c] sm:$0xf]
    %v140 = vld [vmem:[%s2 + $0x20] sm:$0xf]
    %v141 = vld [vmem:[%s2 + $0x24] sm:$0xf]
    %v142 = vld [vmem:[%s2 + $0x28] sm:$0xf]
    %v143 = vld [vmem:[%s2 + $0x2c] sm:$0xf]
    %v144 = vunpack.c.l.bf16 %v132
    %v145 = vunpack.c.l.bf16 %v133
    %v146 = vunpack.c.l.bf16 %v134
    %v147 = vunpack.c.l.bf16 %v135
    %v148 = vunpack.c.l.bf16 %v136
    %v149 = vunpack.c.l.bf16 %v137
    %v150 = vunpack.c.l.bf16 %v138
    %v151 = vunpack.c.l.bf16 %v139
    %v152 = vunpack.c.l.bf16 %v140
    %v153 = vunpack.c.l.bf16 %v141
    %v154 = vunpack.c.l.bf16 %v142
    %v155 = vunpack.c.l.bf16 %v143
    %vm156 = vcmask 523264
    %v158 = vsel %vm156, %v144, 0
    %v161 = vsel %vm156, %v145, 0
    %v164 = vsel %vm156, %v146, 0
    %v167 = vsel %vm156, %v147, 0
    %v170 = vsel %vm156, %v148, 0
    %v173 = vsel %vm156, %v149, 0
    %v176 = vsel %vm156, %v150, 0
    %v179 = vsel %vm156, %v151, 0
    %v182 = vsel %vm156, %v152, 0
    %v185 = vsel %vm156, %v153, 0
    %v188 = vsel %vm156, %v154, 0
    %v191 = vsel %vm156, %v155, 0
    %193 = vmatprep.subr.mxu0 0.0
    %194 = vmatpush1.msra.mxu0 %v123
    %195 = vmatprep.subr.mxu0 0.0
    %196 = vmatpush1.msra.mxu0 %v124
    %197 = vmatprep.subr.mxu0 0.0
    %198 = vmatpush1.msra.mxu0 %v125
    %199 = vmatprep.subr.mxu0 0.0
    %200 = vmatpush1.msra.mxu0 %v126
    %201 = vmatprep.subr.mxu0 0.0
    %202 = vmatpush1.msra.mxu0 %v127
    %203 = vmatprep.subr.mxu0 0.0
    %204 = vmatpush1.msra.mxu0 %v128
    %205 = vmatprep.subr.mxu0 0.0
    %206 = vmatpush1.msra.mxu0 %v129
    %207 = vmatprep.subr.mxu0 0.0
    %208 = vmatpush1.msra.mxu0 %v130
    %209 = vmatprep.subr.mxu0 0.0
    %210 = vmatpush1.msra.mxu0 0.0
    %211 = vmatprep.subr.mxu0 0.0
    %212 = vmatpush1.msra.mxu0 0.0
    %213 = vmatprep.subr.mxu0 0.0
    %214 = vmatpush1.msra.mxu0 0.0
    %215 = vmatprep.subr.mxu0 0.0
    %216 = vmatpush1.msra.mxu0 0.0
    %217 = vmatprep.subr.mxu0 0.0
    %218 = vmatpush1.msra.mxu0 0.0
    %219 = vmatprep.subr.mxu0 0.0
    %220 = vmatpush1.msra.mxu0 0.0
    %221 = vmatprep.subr.mxu0 0.0
    %222 = vmatpush1.msra.mxu0 0.0
    %223 = vmatprep.subr.mxu0 0.0
    %224 = vmatpush1.msra.mxu0 0.0
    %225 = vmatprep.subr.mxu0 0.0
    %226 = vmatpush1.msra.mxu0 0.0
    %227 = vmatprep.subr.mxu0 0.0
    %228 = vmatpush1.msra.mxu0 0.0
    %229 = vmatprep.subr.mxu0 0.0
    %230 = vmatpush1.msra.mxu0 0.0
    %231 = vmatprep.subr.mxu0 0.0
    %232 = vmatpush1.msra.mxu0 0.0
    %233 = vmatprep.subr.mxu0 0.0
    %234 = vmatpush1.msra.mxu0 0.0
    %235 = vmatprep.subr.mxu0 0.0
    %236 = vmatpush1.msra.mxu0 0.0
    %237 = vmatprep.subr.mxu0 0.0
    %238 = vmatpush1.msra.mxu0 0.0
    %239 = vmatprep.subr.mxu0 0.0
    %240 = vmatpush1.msra.mxu0 0.0
    %241 = vmatprep.subr.mxu0 0.0
    %242 = vmatpush1.msra.mxu0 0.0
    %243 = vmatprep.subr.mxu0 0.0
    %244 = vmatpush1.msra.mxu0 0.0
    %245 = vmatprep.subr.mxu0 0.0
    %246 = vmatpush1.msra.mxu0 0.0
    %247 = vmatprep.subr.mxu0 0.0
    %248 = vmatpush1.msra.mxu0 0.0
    %249 = vmatprep.subr.mxu0 0.0
    %250 = vmatpush1.msra.mxu0 0.0
    %251 = vmatprep.subr.mxu0 0.0
    %252 = vmatpush1.msra.mxu0 0.0
    %253 = vmatprep.subr.mxu0 0.0
    %254 = vmatpush1.msra.mxu0 0.0
    %255 = vmatprep.subr.mxu0 0.0
    %256 = vmatpush1.msra.mxu0 0.0
    %257 = vmatprep.mubr.f32.mxu0 0.0
    %258 = vmatmul.mubr.f32.gmra.mrb[0].mxu0 %v158
    %v259 = vpop.f32.mrb[0].mxu0
    %v260 = vadd.f32 0.0, %v259
    %v261 = vpop.f32.mrb[0].mxu0
    %262 = vmatprep.mubr.f32.mxu0 0.0
    %263 = vmatmul.mubr.f32.gmra.mrb[0].mxu0 %v161
    %v264 = vpop.f32.mrb[0].mxu0
    %v265 = vadd.f32 0.0, %v264
    %v266 = vpop.f32.mrb[0].mxu0
    %267 = vmatprep.mubr.f32.mxu0 0.0
    %268 = vmatmul.mubr.f32.gmra.mrb[0].mxu0 %v164
    %v269 = vpop.f32.mrb[0].mxu0
    %v270 = vadd.f32 0.0, %v269
    %v271 = vpop.f32.mrb[0].mxu0
    %272 = vmatprep.mubr.f32.mxu0 0.0
    %273 = vmatmul.mubr.f32.gmra.mrb[0].mxu0 %v167
    %v274 = vpop.f32.mrb[0].mxu0
    %v275 = vadd.f32 0.0, %v274
    %v276 = vpop.f32.mrb[0].mxu0
    %277 = vmatprep.mubr.f32.mxu0 0.0
    %278 = vmatmul.mubr.f32.gmra.mrb[0].mxu0 %v170
    %v279 = vpop.f32.mrb[0].mxu0
    %v280 = vadd.f32 0.0, %v279
    %v281 = vpop.f32.mrb[0].mxu0
    %282 = vmatprep.mubr.f32.mxu0 0.0
    %283 = vmatmul.mubr.f32.gmra.mrb[0].mxu0 %v173
    %v284 = vpop.f32.mrb[0].mxu0
    %v285 = vadd.f32 0.0, %v284
    %v286 = vpop.f32.mrb[0].mxu0
    %287 = vmatprep.mubr.f32.mxu0 0.0
    %288 = vmatmul.mubr.f32.gmra.mrb[0].mxu0 %v176
    %v289 = vpop.f32.mrb[0].mxu0
    %v290 = vadd.f32 0.0, %v289
    %v291 = vpop.f32.mrb[0].mxu0
    %292 = vmatprep.mubr.f32.mxu0 0.0
    %293 = vmatmul.mubr.f32.gmra.mrb[0].mxu0 %v179
    %v294 = vpop.f32.mrb[0].mxu0
    %v295 = vadd.f32 0.0, %v294
    %v296 = vpop.f32.mrb[0].mxu0
    %297 = vmatprep.mubr.f32.mxu0 0.0
    %298 = vmatmul.mubr.f32.gmra.mrb[0].mxu0 %v182
    %v299 = vpop.f32.mrb[0].mxu0
    %v300 = vadd.f32 0.0, %v299
    %v301 = vpop.f32.mrb[0].mxu0
    %302 = vmatprep.mubr.f32.mxu0 0.0
    %303 = vmatmul.mubr.f32.gmra.mrb[0].mxu0 %v185
    %v304 = vpop.f32.mrb[0].mxu0
    %v305 = vadd.f32 0.0, %v304
    %v306 = vpop.f32.mrb[0].mxu0
    %307 = vmatprep.mubr.f32.mxu0 0.0
    %308 = vmatmul.mubr.f32.gmra.mrb[0].mxu0 %v188
    %v309 = vpop.f32.mrb[0].mxu0
    %v310 = vadd.f32 0.0, %v309
    %v311 = vpop.f32.mrb[0].mxu0
    %312 = vmatprep.mubr.f32.mxu0 0.0
    %313 = vmatmul.mubr.f32.gmra.mrb[0].mxu0 %v191
    %v314 = vpop.f32.mrb[0].mxu0
    %v315 = vadd.f32 0.0, %v314
    %v316 = vpop.f32.mrb[0].mxu0
    %317 = vdwg.mxu0
    %v318 = vlaneseq
    %v319 = vshrl.u32 %v318, 7
    %v320 = vsub.s32 0, %v319
    %v321 = vrot.slane %v131, %v320
    %v322 = vmul.f32 %v260, %v321
    %v323 = vmul.f32 %v265, %v321
    %v324 = vmul.f32 %v270, %v321
    %v325 = vmul.f32 %v275, %v321
    %v326 = vmul.f32 %v280, %v321
    %v327 = vmul.f32 %v285, %v321
    %v328 = vlaneseq
    %v329 = vshrl.u32 %v328, 7
    %v330 = vsub.s32 1, %v329
    %v331 = vrot.slane %v131, %v330
    %v332 = vmul.f32 %v290, %v331
    %v333 = vmul.f32 %v295, %v331
    %v334 = vmul.f32 %v300, %v331
    %v335 = vmul.f32 %v305, %v331
    %v336 = vmul.f32 %v310, %v331
    %v337 = vmul.f32 %v315, %v331
    %v338 = vsub.f32 %v322, %v332
    %v339 = vsub.f32 %v323, %v333
    %v340 = vsub.f32 %v324, %v334
    %v341 = vsub.f32 %v325, %v335
    %v342 = vsub.f32 %v326, %v336
    %v343 = vsub.f32 %v327, %v337
    %v344 = vlaneseq
    %v345 = vshrl.u32 %v344, 7
    %v346 = vsub.s32 2, %v345
    %v347 = vrot.slane %v131, %v346
    %v348 = vadd.f32 %v338, %v347
    %v349 = vadd.f32 %v339, %v347
    %v350 = vadd.f32 %v340, %v347
    %v351 = vadd.f32 %v341, %v347
    %v352 = vadd.f32 %v342, %v347
    %v353 = vadd.f32 %v343, %v347
    %v354 = vmax.f32 %v348, 0.0
    %v355 = vmax.f32 %v349, 0.0
    %v356 = vmax.f32 %v350, 0.0
    %v357 = vmax.f32 %v351, 0.0
    %v358 = vmax.f32 %v352, 0.0
    %v359 = vmax.f32 %v353, 0.0
    %vm360 = vcmp.gt.f32.partialorder %v354, 0.01
    %vm361 = vcmp.gt.f32.partialorder %v355, 0.01
    %vm362 = vcmp.gt.f32.partialorder %v356, 0.01
    %vm363 = vcmp.gt.f32.partialorder %v357, 0.01
    %vm364 = vcmp.gt.f32.partialorder %v358, 0.01
    %vm365 = vcmp.gt.f32.partialorder %v359, 0.01
    %v366 = vsub.f32 %v354, 0.01
    %v367 = vsub.f32 %v355, 0.01
    %v368 = vsub.f32 %v356, 0.01
    %v369 = vsub.f32 %v357, 0.01
    %v370 = vsub.f32 %v358, 0.01
    %v371 = vsub.f32 %v359, 0.01
    %vm372 = vcmp.lt.f32.partialorder %v354, -0.01
    %vm373 = vcmp.lt.f32.partialorder %v355, -0.01
    %vm374 = vcmp.lt.f32.partialorder %v356, -0.01
    %vm375 = vcmp.lt.f32.partialorder %v357, -0.01
    %vm376 = vcmp.lt.f32.partialorder %v358, -0.01
    %vm377 = vcmp.lt.f32.partialorder %v359, -0.01
    %v378 = vadd.f32 %v354, 0.01
    %v379 = vadd.f32 %v355, 0.01
    %v380 = vadd.f32 %v356, 0.01
    %v381 = vadd.f32 %v357, 0.01
    %v382 = vadd.f32 %v358, 0.01
    %v383 = vadd.f32 %v359, 0.01
    %v384 = vsel %vm372, %v378, 0.0
    %v385 = vsel %vm373, %v379, 0.0
    %v386 = vsel %vm374, %v380, 0.0
    %v387 = vsel %vm375, %v381, 0.0
    %v388 = vsel %vm376, %v382, 0.0
    %v389 = vsel %vm377, %v383, 0.0
    %v390 = vsel %vm360, %v366, %v384
    %v391 = vsel %vm361, %v367, %v385
    %v392 = vsel %vm362, %v368, %v386
    %v393 = vsel %vm363, %v369, %v387
    %v394 = vsel %vm364, %v370, %v388
    %v395 = vsel %vm365, %v371, %v389
    %v396 = vmul.f32 %v290, %v321
    %v397 = vmul.f32 %v295, %v321
    %v398 = vmul.f32 %v300, %v321
    %v399 = vmul.f32 %v305, %v321
    %v400 = vmul.f32 %v310, %v321
    %v401 = vmul.f32 %v315, %v321
    %v402 = vmul.f32 %v260, %v331
    %v403 = vmul.f32 %v265, %v331
    %v404 = vmul.f32 %v270, %v331
    %v405 = vmul.f32 %v275, %v331
    %v406 = vmul.f32 %v280, %v331
    %v407 = vmul.f32 %v285, %v331
    %v408 = vadd.f32 %v396, %v402
    %v409 = vadd.f32 %v397, %v403
    %v410 = vadd.f32 %v398, %v404
    %v411 = vadd.f32 %v399, %v405
    %v412 = vadd.f32 %v400, %v406
    %v413 = vadd.f32 %v401, %v407
    %v414 = vlaneseq
    %v415 = vshrl.u32 %v414, 7
    %v416 = vsub.s32 3, %v415
    %v417 = vrot.slane %v131, %v416
    %v418 = vadd.f32 %v408, %v417
    %v419 = vadd.f32 %v409, %v417
    %v420 = vadd.f32 %v410, %v417
    %v421 = vadd.f32 %v411, %v417
    %v422 = vadd.f32 %v412, %v417
    %v423 = vadd.f32 %v413, %v417
    %v424 = vmax.f32 %v418, 0.0
    %v425 = vmax.f32 %v419, 0.0
    %v426 = vmax.f32 %v420, 0.0
    %v427 = vmax.f32 %v421, 0.0
    %v428 = vmax.f32 %v422, 0.0
    %v429 = vmax.f32 %v423, 0.0
    %vm430 = vcmp.gt.f32.partialorder %v424, 0.01
    %vm431 = vcmp.gt.f32.partialorder %v425, 0.01
    %vm432 = vcmp.gt.f32.partialorder %v426, 0.01
    %vm433 = vcmp.gt.f32.partialorder %v427, 0.01
    %vm434 = vcmp.gt.f32.partialorder %v428, 0.01
    %vm435 = vcmp.gt.f32.partialorder %v429, 0.01
    %v436 = vsub.f32 %v424, 0.01
    %v437 = vsub.f32 %v425, 0.01
    %v438 = vsub.f32 %v426, 0.01
    %v439 = vsub.f32 %v427, 0.01
    %v440 = vsub.f32 %v428, 0.01
    %v441 = vsub.f32 %v429, 0.01
    %vm442 = vcmp.lt.f32.partialorder %v424, -0.01
    %vm443 = vcmp.lt.f32.partialorder %v425, -0.01
    %vm444 = vcmp.lt.f32.partialorder %v426, -0.01
    %vm445 = vcmp.lt.f32.partialorder %v427, -0.01
    %vm446 = vcmp.lt.f32.partialorder %v428, -0.01
    %vm447 = vcmp.lt.f32.partialorder %v429, -0.01
    %v448 = vadd.f32 %v424, 0.01
    %v449 = vadd.f32 %v425, 0.01
    %v450 = vadd.f32 %v426, 0.01
    %v451 = vadd.f32 %v427, 0.01
    %v452 = vadd.f32 %v428, 0.01
    %v453 = vadd.f32 %v429, 0.01
    %v454 = vsel %vm442, %v448, 0.0
    %v455 = vsel %vm443, %v449, 0.0
    %v456 = vsel %vm444, %v450, 0.0
    %v457 = vsel %vm445, %v451, 0.0
    %v458 = vsel %vm446, %v452, 0.0
    %v459 = vsel %vm447, %v453, 0.0
    %v460 = vsel %vm430, %v436, %v454
    %v461 = vsel %vm431, %v437, %v455
    %v462 = vsel %vm432, %v438, %v456
    %v463 = vsel %vm433, %v439, %v457
    %v464 = vsel %vm434, %v440, %v458
    %v465 = vsel %vm435, %v441, %v459
    %v466 = vld [vmem:[%s3] sm:$0xf]
    %v467 = vld [vmem:[%s3 + $0x4] sm:$0xf]
    %v468 = vld [vmem:[%s3 + $0x8] sm:$0xf]
    %v469 = vld [vmem:[%s3 + $0xc] sm:$0xf]
    %v470 = vld [vmem:[%s3 + $0x10] sm:$0xf]
    %v471 = vld [vmem:[%s3 + $0x14] sm:$0xf]
    %v472 = vld [vmem:[%s3 + $0x18] sm:$0xf]
    %v473 = vld [vmem:[%s3 + $0x1c] sm:$0xf]
    %v474 = vld [vmem:[%s3 + $0x20] sm:$0xf]
    %v475 = vld [vmem:[%s3 + $0x24] sm:$0xf]
    %v476 = vunpack.c.l.bf16 %v466
    %v477 = vunpack.c.l.bf16 %v467
    %v478 = vunpack.c.l.bf16 %v468
    %v479 = vunpack.c.l.bf16 %v469
    %v480 = vunpack.c.l.bf16 %v470
    %v481 = vunpack.c.l.bf16 %v471
    %v482 = vunpack.c.l.bf16 %v472
    %v483 = vunpack.c.l.bf16 %v473
    %v484 = vunpack.c.l.bf16 %v474
    %v485 = vunpack.c.l.bf16 %v475
    %vm486 = vcmask 785408
    %v488 = vsel %vm486, %v476, 0
    %v491 = vsel %vm486, %v477, 0
    %v494 = vsel %vm486, %v478, 0
    %v497 = vsel %vm486, %v479, 0
    %v500 = vsel %vm486, %v480, 0
    %v503 = vsel %vm486, %v481, 0
    %v506 = vsel %vm486, %v482, 0
    %v509 = vsel %vm486, %v483, 0
    %v512 = vsel %vm486, %v484, 0
    %v515 = vsel %vm486, %v485, 0
    %517 = vmatprep.subr.mxu0 0.0
    %518 = vmatpush1.msra.mxu0 %v390
    %519 = vmatprep.subr.mxu0 0.0
    %520 = vmatpush1.msra.mxu0 %v391
    %521 = vmatprep.subr.mxu0 0.0
    %522 = vmatpush1.msra.mxu0 %v392
    %523 = vmatprep.subr.mxu0 0.0
    %524 = vmatpush1.msra.mxu0 %v393
    %525 = vmatprep.subr.mxu0 0.0
    %526 = vmatpush1.msra.mxu0 %v394
    %527 = vmatprep.subr.mxu0 0.0
    %528 = vmatpush1.msra.mxu0 %v395
    %529 = vmatprep.subr.mxu0 0.0
    %530 = vmatpush1.msra.mxu0 %v460
    %531 = vmatprep.subr.mxu0 0.0
    %532 = vmatpush1.msra.mxu0 %v461
    %533 = vmatprep.subr.mxu0 0.0
    %534 = vmatpush1.msra.mxu0 %v462
    %535 = vmatprep.subr.mxu0 0.0
    %536 = vmatpush1.msra.mxu0 %v463
    %537 = vmatprep.subr.mxu0 0.0
    %538 = vmatpush1.msra.mxu0 %v464
    %539 = vmatprep.subr.mxu0 0.0
    %540 = vmatpush1.msra.mxu0 %v465
    %541 = vmatprep.subr.mxu0 0.0
    %542 = vmatpush1.msra.mxu0 0.0
    %543 = vmatprep.subr.mxu0 0.0
    %544 = vmatpush1.msra.mxu0 0.0
    %545 = vmatprep.subr.mxu0 0.0
    %546 = vmatpush1.msra.mxu0 0.0
    %547 = vmatprep.subr.mxu0 0.0
    %548 = vmatpush1.msra.mxu0 0.0
    %549 = vmatprep.subr.mxu0 0.0
    %550 = vmatpush1.msra.mxu0 0.0
    %551 = vmatprep.subr.mxu0 0.0
    %552 = vmatpush1.msra.mxu0 0.0
    %553 = vmatprep.subr.mxu0 0.0
    %554 = vmatpush1.msra.mxu0 0.0
    %555 = vmatprep.subr.mxu0 0.0
    %556 = vmatpush1.msra.mxu0 0.0
    %557 = vmatprep.subr.mxu0 0.0
    %558 = vmatpush1.msra.mxu0 0.0
    %559 = vmatprep.subr.mxu0 0.0
    %560 = vmatpush1.msra.mxu0 0.0
    %561 = vmatprep.subr.mxu0 0.0
    %562 = vmatpush1.msra.mxu0 0.0
    %563 = vmatprep.subr.mxu0 0.0
    %564 = vmatpush1.msra.mxu0 0.0
    %565 = vmatprep.subr.mxu0 0.0
    %566 = vmatpush1.msra.mxu0 0.0
    %567 = vmatprep.subr.mxu0 0.0
    %568 = vmatpush1.msra.mxu0 0.0
    %569 = vmatprep.subr.mxu0 0.0
    %570 = vmatpush1.msra.mxu0 0.0
    %571 = vmatprep.subr.mxu0 0.0
    %572 = vmatpush1.msra.mxu0 0.0
    %573 = vmatprep.subr.mxu0 0.0
    %574 = vmatpush1.msra.mxu0 0.0
    %575 = vmatprep.subr.mxu0 0.0
    %576 = vmatpush1.msra.mxu0 0.0
    %577 = vmatprep.subr.mxu0 0.0
    %578 = vmatpush1.msra.mxu0 0.0
    %579 = vmatprep.subr.mxu0 0.0
    %580 = vmatpush1.msra.mxu0 0.0
    %581 = vmatprep.mubr.f32.mxu0 0.0
    %582 = vmatmul.mubr.f32.gmra.mrb[0].mxu0 %v488
    %v583 = vpop.f32.mrb[0].mxu0
    %v584 = vadd.f32 0.0, %v583
    %v585 = vpop.f32.mrb[0].mxu0
    %586 = vmatprep.mubr.f32.mxu0 0.0
    %587 = vmatmul.mubr.f32.gmra.mrb[0].mxu0 %v491
    %v588 = vpop.f32.mrb[0].mxu0
    %v589 = vadd.f32 0.0, %v588
    %v590 = vpop.f32.mrb[0].mxu0
    %591 = vmatprep.mubr.f32.mxu0 0.0
    %592 = vmatmul.mubr.f32.gmra.mrb[0].mxu0 %v494
    %v593 = vpop.f32.mrb[0].mxu0
    %v594 = vadd.f32 0.0, %v593
    %v595 = vpop.f32.mrb[0].mxu0
    %596 = vmatprep.mubr.f32.mxu0 0.0
    %597 = vmatmul.mubr.f32.gmra.mrb[0].mxu0 %v497
    %v598 = vpop.f32.mrb[0].mxu0
    %v599 = vadd.f32 0.0, %v598
    %v600 = vpop.f32.mrb[0].mxu0
    %601 = vmatprep.mubr.f32.mxu0 0.0
    %602 = vmatmul.mubr.f32.gmra.mrb[0].mxu0 %v500
    %v603 = vpop.f32.mrb[0].mxu0
    %v604 = vadd.f32 0.0, %v603
    %v605 = vpop.f32.mrb[0].mxu0
    %606 = vmatprep.mubr.f32.mxu0 0.0
    %607 = vmatmul.mubr.f32.gmra.mrb[0].mxu0 %v503
    %v608 = vpop.f32.mrb[0].mxu0
    %v609 = vadd.f32 0.0, %v608
    %v610 = vpop.f32.mrb[0].mxu0
    %611 = vmatprep.mubr.f32.mxu0 0.0
    %612 = vmatmul.mubr.f32.gmra.mrb[0].mxu0 %v506
    %v613 = vpop.f32.mrb[0].mxu0
    %v614 = vadd.f32 0.0, %v613
    %v615 = vpop.f32.mrb[0].mxu0
    %616 = vmatprep.mubr.f32.mxu0 0.0
    %617 = vmatmul.mubr.f32.gmra.mrb[0].mxu0 %v509
    %v618 = vpop.f32.mrb[0].mxu0
    %v619 = vadd.f32 0.0, %v618
    %v620 = vpop.f32.mrb[0].mxu0
    %621 = vmatprep.mubr.f32.mxu0 0.0
    %622 = vmatmul.mubr.f32.gmra.mrb[0].mxu0 %v512
    %v623 = vpop.f32.mrb[0].mxu0
    %v624 = vadd.f32 0.0, %v623
    %v625 = vpop.f32.mrb[0].mxu0
    %626 = vmatprep.mubr.f32.mxu0 0.0
    %627 = vmatmul.mubr.f32.gmra.mrb[0].mxu0 %v515
    %v628 = vpop.f32.mrb[0].mxu0
    %v629 = vadd.f32 0.0, %v628
    %v630 = vpop.f32.mrb[0].mxu0
    %631 = vdwg.mxu0
    %v632 = vlaneseq
    %v633 = vshrl.u32 %v632, 7
    %v634 = vsub.s32 4, %v633
    %v635 = vrot.slane %v131, %v634
    %v636 = vmul.f32 %v584, %v635
    %v637 = vmul.f32 %v589, %v635
    %v638 = vmul.f32 %v594, %v635
    %v639 = vmul.f32 %v599, %v635
    %v640 = vmul.f32 %v604, %v635
    %v641 = vlaneseq
    %v642 = vshrl.u32 %v641, 7
    %v643 = vsub.s32 5, %v642
    %v644 = vrot.slane %v131, %v643
    %v645 = vmul.f32 %v609, %v644
    %v646 = vmul.f32 %v614, %v644
    %v647 = vmul.f32 %v619, %v644
    %v648 = vmul.f32 %v624, %v644
    %v649 = vmul.f32 %v629, %v644
    %v650 = vsub.f32 %v636, %v645
    %v651 = vsub.f32 %v637, %v646
    %v652 = vsub.f32 %v638, %v647
    %v653 = vsub.f32 %v639, %v648
    %v654 = vsub.f32 %v640, %v649
    %v655 = vlaneseq
    %v656 = vshrl.u32 %v655, 7
    %v657 = vsub.s32 6, %v656
    %v658 = vrot.slane %v131, %v657
    %v659 = vadd.f32 %v650, %v658
    %v660 = vadd.f32 %v651, %v658
    %v661 = vadd.f32 %v652, %v658
    %v662 = vadd.f32 %v653, %v658
    %v663 = vadd.f32 %v654, %v658
    %v664 = vmax.f32 %v659, 0.0
    %v665 = vmax.f32 %v660, 0.0
    %v666 = vmax.f32 %v661, 0.0
    %v667 = vmax.f32 %v662, 0.0
    %v668 = vmax.f32 %v663, 0.0
    %vm669 = vcmp.gt.f32.partialorder %v664, 0.01
    %vm670 = vcmp.gt.f32.partialorder %v665, 0.01
    %vm671 = vcmp.gt.f32.partialorder %v666, 0.01
    %vm672 = vcmp.gt.f32.partialorder %v667, 0.01
    %vm673 = vcmp.gt.f32.partialorder %v668, 0.01
    %v674 = vsub.f32 %v664, 0.01
    %v675 = vsub.f32 %v665, 0.01
    %v676 = vsub.f32 %v666, 0.01
    %v677 = vsub.f32 %v667, 0.01
    %v678 = vsub.f32 %v668, 0.01
    %vm679 = vcmp.lt.f32.partialorder %v664, -0.01
    %vm680 = vcmp.lt.f32.partialorder %v665, -0.01
    %vm681 = vcmp.lt.f32.partialorder %v666, -0.01
    %vm682 = vcmp.lt.f32.partialorder %v667, -0.01
    %vm683 = vcmp.lt.f32.partialorder %v668, -0.01
    %v684 = vadd.f32 %v664, 0.01
    %v685 = vadd.f32 %v665, 0.01
    %v686 = vadd.f32 %v666, 0.01
    %v687 = vadd.f32 %v667, 0.01
    %v688 = vadd.f32 %v668, 0.01
    %v689 = vsel %vm679, %v684, 0.0
    %v690 = vsel %vm680, %v685, 0.0
    %v691 = vsel %vm681, %v686, 0.0
    %v692 = vsel %vm682, %v687, 0.0
    %v693 = vsel %vm683, %v688, 0.0
    %v694 = vsel %vm669, %v674, %v689
    %v695 = vsel %vm670, %v675, %v690
    %v696 = vsel %vm671, %v676, %v691
    %v697 = vsel %vm672, %v677, %v692
    %v698 = vsel %vm673, %v678, %v693
    %v699 = vmul.f32 %v609, %v635
    %v700 = vmul.f32 %v614, %v635
    %v701 = vmul.f32 %v619, %v635
    %v702 = vmul.f32 %v624, %v635
    %v703 = vmul.f32 %v629, %v635
    %v704 = vmul.f32 %v584, %v644
    %v705 = vmul.f32 %v589, %v644
    %v706 = vmul.f32 %v594, %v644
    %v707 = vmul.f32 %v599, %v644
    %v708 = vmul.f32 %v604, %v644
    %v709 = vadd.f32 %v699, %v704
    %v710 = vadd.f32 %v700, %v705
    %v711 = vadd.f32 %v701, %v706
    %v712 = vadd.f32 %v702, %v707
    %v713 = vadd.f32 %v703, %v708
    %v714 = vlaneseq
    %v715 = vshrl.u32 %v714, 7
    %v716 = vsub.s32 7, %v715
    %v717 = vrot.slane %v131, %v716
    %v718 = vadd.f32 %v709, %v717
    %v719 = vadd.f32 %v710, %v717
    %v720 = vadd.f32 %v711, %v717
    %v721 = vadd.f32 %v712, %v717
    %v722 = vadd.f32 %v713, %v717
    %v723 = vmax.f32 %v718, 0.0
    %v724 = vmax.f32 %v719, 0.0
    %v725 = vmax.f32 %v720, 0.0
    %v726 = vmax.f32 %v721, 0.0
    %v727 = vmax.f32 %v722, 0.0
    %vm728 = vcmp.gt.f32.partialorder %v723, 0.01
    %vm729 = vcmp.gt.f32.partialorder %v724, 0.01
    %vm730 = vcmp.gt.f32.partialorder %v725, 0.01
    %vm731 = vcmp.gt.f32.partialorder %v726, 0.01
    %vm732 = vcmp.gt.f32.partialorder %v727, 0.01
    %v733 = vsub.f32 %v723, 0.01
    %v734 = vsub.f32 %v724, 0.01
    %v735 = vsub.f32 %v725, 0.01
    %v736 = vsub.f32 %v726, 0.01
    %v737 = vsub.f32 %v727, 0.01
    %vm738 = vcmp.lt.f32.partialorder %v723, -0.01
    %vm739 = vcmp.lt.f32.partialorder %v724, -0.01
    %vm740 = vcmp.lt.f32.partialorder %v725, -0.01
    %vm741 = vcmp.lt.f32.partialorder %v726, -0.01
    %vm742 = vcmp.lt.f32.partialorder %v727, -0.01
    %v743 = vadd.f32 %v723, 0.01
    %v744 = vadd.f32 %v724, 0.01
    %v745 = vadd.f32 %v725, 0.01
    %v746 = vadd.f32 %v726, 0.01
    %v747 = vadd.f32 %v727, 0.01
    %v748 = vsel %vm738, %v743, 0.0
    %v749 = vsel %vm739, %v744, 0.0
    %v750 = vsel %vm740, %v745, 0.0
    %v751 = vsel %vm741, %v746, 0.0
    %v752 = vsel %vm742, %v747, 0.0
    %v753 = vsel %vm728, %v733, %v748
    %v754 = vsel %vm729, %v734, %v749
    %v755 = vsel %vm730, %v735, %v750
    %v756 = vsel %vm731, %v736, %v751
    %v757 = vsel %vm732, %v737, %v752
    %v758 = vld [vmem:[%s4] sm:$0xf]
    %v759 = vld [vmem:[%s4 + $0x4] sm:$0xf]
    %v760 = vld [vmem:[%s4 + $0x8] sm:$0xf]
    %v761 = vld [vmem:[%s4 + $0xc] sm:$0xf]
    %v762 = vld [vmem:[%s4 + $0x10] sm:$0xf]
    %v763 = vld [vmem:[%s4 + $0x14] sm:$0xf]
    %v764 = vld [vmem:[%s4 + $0x18] sm:$0xf]
    %v765 = vld [vmem:[%s4 + $0x1c] sm:$0xf]
    %v766 = vunpack.c.l.bf16 %v758
    %v767 = vunpack.c.l.bf16 %v759
    %v768 = vunpack.c.l.bf16 %v760
    %v769 = vunpack.c.l.bf16 %v761
    %v770 = vunpack.c.l.bf16 %v762
    %v771 = vunpack.c.l.bf16 %v763
    %v772 = vunpack.c.l.bf16 %v764
    %v773 = vunpack.c.l.bf16 %v765
    %vm774 = vcmask 654336
    %v776 = vsel %vm774, %v766, 0
    %v779 = vsel %vm774, %v767, 0
    %v782 = vsel %vm774, %v768, 0
    %v785 = vsel %vm774, %v769, 0
    %v788 = vsel %vm774, %v770, 0
    %v791 = vsel %vm774, %v771, 0
    %v794 = vsel %vm774, %v772, 0
    %v797 = vsel %vm774, %v773, 0
    %799 = vmatprep.subr.mxu0 0.0
    %800 = vmatpush1.msra.mxu0 %v694
    %801 = vmatprep.subr.mxu0 0.0
    %802 = vmatpush1.msra.mxu0 %v695
    %803 = vmatprep.subr.mxu0 0.0
    %804 = vmatpush1.msra.mxu0 %v696
    %805 = vmatprep.subr.mxu0 0.0
    %806 = vmatpush1.msra.mxu0 %v697
    %807 = vmatprep.subr.mxu0 0.0
    %808 = vmatpush1.msra.mxu0 %v698
    %809 = vmatprep.subr.mxu0 0.0
    %810 = vmatpush1.msra.mxu0 %v753
    %811 = vmatprep.subr.mxu0 0.0
    %812 = vmatpush1.msra.mxu0 %v754
    %813 = vmatprep.subr.mxu0 0.0
    %814 = vmatpush1.msra.mxu0 %v755
    %815 = vmatprep.subr.mxu0 0.0
    %816 = vmatpush1.msra.mxu0 %v756
    %817 = vmatprep.subr.mxu0 0.0
    %818 = vmatpush1.msra.mxu0 %v757
    %819 = vmatprep.subr.mxu0 0.0
    %820 = vmatpush1.msra.mxu0 0.0
    %821 = vmatprep.subr.mxu0 0.0
    %822 = vmatpush1.msra.mxu0 0.0
    %823 = vmatprep.subr.mxu0 0.0
    %824 = vmatpush1.msra.mxu0 0.0
    %825 = vmatprep.subr.mxu0 0.0
    %826 = vmatpush1.msra.mxu0 0.0
    %827 = vmatprep.subr.mxu0 0.0
    %828 = vmatpush1.msra.mxu0 0.0
    %829 = vmatprep.subr.mxu0 0.0
    %830 = vmatpush1.msra.mxu0 0.0
    %831 = vmatprep.subr.mxu0 0.0
    %832 = vmatpush1.msra.mxu0 0.0
    %833 = vmatprep.subr.mxu0 0.0
    %834 = vmatpush1.msra.mxu0 0.0
    %835 = vmatprep.subr.mxu0 0.0
    %836 = vmatpush1.msra.mxu0 0.0
    %837 = vmatprep.subr.mxu0 0.0
    %838 = vmatpush1.msra.mxu0 0.0
    %839 = vmatprep.subr.mxu0 0.0
    %840 = vmatpush1.msra.mxu0 0.0
    %841 = vmatprep.subr.mxu0 0.0
    %842 = vmatpush1.msra.mxu0 0.0
    %843 = vmatprep.subr.mxu0 0.0
    %844 = vmatpush1.msra.mxu0 0.0
    %845 = vmatprep.subr.mxu0 0.0
    %846 = vmatpush1.msra.mxu0 0.0
    %847 = vmatprep.subr.mxu0 0.0
    %848 = vmatpush1.msra.mxu0 0.0
    %849 = vmatprep.subr.mxu0 0.0
    %850 = vmatpush1.msra.mxu0 0.0
    %851 = vmatprep.subr.mxu0 0.0
    %852 = vmatpush1.msra.mxu0 0.0
    %853 = vmatprep.subr.mxu0 0.0
    %854 = vmatpush1.msra.mxu0 0.0
    %855 = vmatprep.subr.mxu0 0.0
    %856 = vmatpush1.msra.mxu0 0.0
    %857 = vmatprep.subr.mxu0 0.0
    %858 = vmatpush1.msra.mxu0 0.0
    %859 = vmatprep.subr.mxu0 0.0
    %860 = vmatpush1.msra.mxu0 0.0
    %861 = vmatprep.subr.mxu0 0.0
    %862 = vmatpush1.msra.mxu0 0.0
    %863 = vmatprep.mubr.f32.mxu0 0.0
    %864 = vmatmul.mubr.f32.gmra.mrb[0].mxu0 %v776
    %v865 = vpop.f32.mrb[0].mxu0
    %v866 = vadd.f32 %v123, %v865
    %v867 = vpop.f32.mrb[0].mxu0
    %868 = vmatprep.mubr.f32.mxu0 0.0
    %869 = vmatmul.mubr.f32.gmra.mrb[0].mxu0 %v779
    %v870 = vpop.f32.mrb[0].mxu0
    %v871 = vadd.f32 %v124, %v870
    %v872 = vpop.f32.mrb[0].mxu0
    %873 = vmatprep.mubr.f32.mxu0 0.0
    %874 = vmatmul.mubr.f32.gmra.mrb[0].mxu0 %v782
    %v875 = vpop.f32.mrb[0].mxu0
    %v876 = vadd.f32 %v125, %v875
    %v877 = vpop.f32.mrb[0].mxu0
    %878 = vmatprep.mubr.f32.mxu0 0.0
    %879 = vmatmul.mubr.f32.gmra.mrb[0].mxu0 %v785
    %v880 = vpop.f32.mrb[0].mxu0
    %v881 = vadd.f32 %v126, %v880
    %v882 = vpop.f32.mrb[0].mxu0
    %883 = vmatprep.mubr.f32.mxu0 0.0
    %884 = vmatmul.mubr.f32.gmra.mrb[0].mxu0 %v788
    %v885 = vpop.f32.mrb[0].mxu0
    %v886 = vadd.f32 %v127, %v885
    %v887 = vpop.f32.mrb[0].mxu0
    %888 = vmatprep.mubr.f32.mxu0 0.0
    %889 = vmatmul.mubr.f32.gmra.mrb[0].mxu0 %v791
    %v890 = vpop.f32.mrb[0].mxu0
    %v891 = vadd.f32 %v128, %v890
    %v892 = vpop.f32.mrb[0].mxu0
    %893 = vmatprep.mubr.f32.mxu0 0.0
    %894 = vmatmul.mubr.f32.gmra.mrb[0].mxu0 %v794
    %v895 = vpop.f32.mrb[0].mxu0
    %v896 = vadd.f32 %v129, %v895
    %v897 = vpop.f32.mrb[0].mxu0
    %898 = vmatprep.mubr.f32.mxu0 0.0
    %899 = vmatmul.mubr.f32.gmra.mrb[0].mxu0 %v797
    %v900 = vpop.f32.mrb[0].mxu0
    %v901 = vadd.f32 %v130, %v900
    %v902 = vpop.f32.mrb[0].mxu0
    %903 = vdwg.mxu0
    %s904 = smul.u32 4, 128
    %s905 = smul.u32 %s904, 2
    %s906 = sshll.u32 %s905, 4
    %907 = dma.done [#allocation3], %s906
    %v908 = vld [vmem:[#allocation2] sm:$0xff]
    %v909 = vld [vmem:[#allocation2 + $0x8] sm:$0xff]
    %v910 = vld [vmem:[#allocation2 + $0x10] sm:$0xff]
    %v911 = vld [vmem:[#allocation2 + $0x18] sm:$0xff]
    %v912 = vld [vmem:[#allocation2 + $0x20] sm:$0xff]
    %v913 = vld [vmem:[#allocation2 + $0x28] sm:$0xff]
    %v914 = vld [vmem:[#allocation2 + $0x30] sm:$0xff]
    %v915 = vld [vmem:[#allocation2 + $0x38] sm:$0xff]
    %v916 = vld [vmem:[#allocation2 + $0x40] sm:$0xff]
    %v917 = vld [vmem:[#allocation2 + $0x48] sm:$0xff]
    %v918 = vld [vmem:[#allocation2 + $0x50] sm:$0xff]
    %v919 = vld [vmem:[#allocation2 + $0x58] sm:$0xff]
    %v920 = vld [vmem:[#allocation2 + $0x60] sm:$0xff]
    %v921 = vld [vmem:[#allocation2 + $0x68] sm:$0xff]
    %v922 = vld [vmem:[#allocation2 + $0x70] sm:$0xff]
    %v923 = vld [vmem:[#allocation2 + $0x78] sm:$0xff]
    %v924 = vld [vmem:[#allocation2 + $0x80] sm:$0xff]
    %v925 = vld [vmem:[#allocation2 + $0x88] sm:$0xff]
    %v926 = vld [vmem:[#allocation2 + $0x90] sm:$0xff]
    %v927 = vld [vmem:[#allocation2 + $0x98] sm:$0xff]
    %v928 = vld [vmem:[#allocation2 + $0xa0] sm:$0xff]
    %v929 = vld [vmem:[#allocation2 + $0xa8] sm:$0xff]
    %v930 = vld [vmem:[#allocation2 + $0xb0] sm:$0xff]
    %v931 = vld [vmem:[#allocation2 + $0xb8] sm:$0xff]
    %v932 = vld [vmem:[#allocation2 + $0xc0] sm:$0xff]
    %v933 = vld [vmem:[#allocation2 + $0xc8] sm:$0xff]
    %v934 = vld [vmem:[#allocation2 + $0xd0] sm:$0xff]
    %v935 = vld [vmem:[#allocation2 + $0xd8] sm:$0xff]
    %v936 = vld [vmem:[#allocation2 + $0xe0] sm:$0xff]
    %v937 = vld [vmem:[#allocation2 + $0xe8] sm:$0xff]
    %v938 = vld [vmem:[#allocation2 + $0xf0] sm:$0xff]
    %v939 = vld [vmem:[#allocation2 + $0xf8] sm:$0xff]
    %v940 = vld [vmem:[#allocation2 + $0x100] sm:$0xff]
    %v941 = vld [vmem:[#allocation2 + $0x108] sm:$0xff]
    %v942 = vld [vmem:[#allocation2 + $0x110] sm:$0xff]
    %v943 = vld [vmem:[#allocation2 + $0x118] sm:$0xff]
    %v944 = vld [vmem:[#allocation2 + $0x120] sm:$0xff]
    %v945 = vld [vmem:[#allocation2 + $0x128] sm:$0xff]
    %v946 = vld [vmem:[#allocation2 + $0x130] sm:$0xff]
    %v947 = vld [vmem:[#allocation2 + $0x138] sm:$0xff]
    %v948 = vld [vmem:[#allocation2 + $0x140] sm:$0xff]
    %v949 = vld [vmem:[#allocation2 + $0x148] sm:$0xff]
    %v950 = vld [vmem:[#allocation2 + $0x150] sm:$0xff]
    %v951 = vld [vmem:[#allocation2 + $0x158] sm:$0xff]
    %v952 = vld [vmem:[#allocation2 + $0x160] sm:$0xff]
    %v953 = vld [vmem:[#allocation2 + $0x168] sm:$0xff]
    %v954 = vld [vmem:[#allocation2 + $0x170] sm:$0xff]
    %v955 = vld [vmem:[#allocation2 + $0x178] sm:$0xff]
    %v956 = vld [vmem:[#allocation2 + $0x180] sm:$0xff]
    %v957 = vld [vmem:[#allocation2 + $0x188] sm:$0xff]
    %v958 = vld [vmem:[#allocation2 + $0x190] sm:$0xff]
    %v959 = vld [vmem:[#allocation2 + $0x198] sm:$0xff]
    %v960 = vld [vmem:[#allocation2 + $0x1a0] sm:$0xff]
    %v961 = vld [vmem:[#allocation2 + $0x1a8] sm:$0xff]
    %v962 = vld [vmem:[#allocation2 + $0x1b0] sm:$0xff]
    %v963 = vld [vmem:[#allocation2 + $0x1b8] sm:$0xff]
    %v964 = vld [vmem:[#allocation2 + $0x1c0] sm:$0xff]
    %v965 = vld [vmem:[#allocation2 + $0x1c8] sm:$0xff]
    %v966 = vld [vmem:[#allocation2 + $0x1d0] sm:$0xff]
    %v967 = vld [vmem:[#allocation2 + $0x1d8] sm:$0xff]
    %v968 = vld [vmem:[#allocation2 + $0x1e0] sm:$0xff]
    %v969 = vld [vmem:[#allocation2 + $0x1e8] sm:$0xff]
    %v970 = vld [vmem:[#allocation2 + $0x1f0] sm:$0xff]
    %v971 = vld [vmem:[#allocation2 + $0x1f8] sm:$0xff]
    %v972 = vld [vmem:[#allocation2 + $0x200] sm:$0xff]
    %v973 = vld [vmem:[#allocation2 + $0x208] sm:$0xff]
    %v974 = vld [vmem:[#allocation2 + $0x210] sm:$0xff]
    %v975 = vld [vmem:[#allocation2 + $0x218] sm:$0xff]
    %v976 = vld [vmem:[#allocation2 + $0x220] sm:$0xff]
    %v977 = vld [vmem:[#allocation2 + $0x228] sm:$0xff]
    %v978 = vld [vmem:[#allocation2 + $0x230] sm:$0xff]
    %v979 = vld [vmem:[#allocation2 + $0x238] sm:$0xff]
    %v980 = vld [vmem:[#allocation2 + $0x240] sm:$0xff]
    %v981 = vld [vmem:[#allocation2 + $0x248] sm:$0xff]
    %v982 = vld [vmem:[#allocation2 + $0x250] sm:$0xff]
    %v983 = vld [vmem:[#allocation2 + $0x258] sm:$0xff]
    %v984 = vld [vmem:[#allocation2 + $0x260] sm:$0xff]
    %v985 = vld [vmem:[#allocation2 + $0x268] sm:$0xff]
    %v986 = vld [vmem:[#allocation2 + $0x270] sm:$0xff]
    %v987 = vld [vmem:[#allocation2 + $0x278] sm:$0xff]
    %v988 = vld [vmem:[#allocation2 + $0x280] sm:$0xff]
    %v989 = vld [vmem:[#allocation2 + $0x288] sm:$0xff]
    %v990 = vld [vmem:[#allocation2 + $0x290] sm:$0xff]
    %v991 = vld [vmem:[#allocation2 + $0x298] sm:$0xff]
    %v992 = vld [vmem:[#allocation2 + $0x2a0] sm:$0xff]
    %v993 = vld [vmem:[#allocation2 + $0x2a8] sm:$0xff]
    %v994 = vld [vmem:[#allocation2 + $0x2b0] sm:$0xff]
    %v995 = vld [vmem:[#allocation2 + $0x2b8] sm:$0xff]
    %v996 = vld [vmem:[#allocation2 + $0x2c0] sm:$0xff]
    %v997 = vld [vmem:[#allocation2 + $0x2c8] sm:$0xff]
    %v998 = vld [vmem:[#allocation2 + $0x2d0] sm:$0xff]
    %v999 = vld [vmem:[#allocation2 + $0x2d8] sm:$0xff]
    %v1000 = vld [vmem:[#allocation2 + $0x2e0] sm:$0xff]
    %v1001 = vld [vmem:[#allocation2 + $0x2e8] sm:$0xff]
    %v1002 = vld [vmem:[#allocation2 + $0x2f0] sm:$0xff]
    %v1003 = vld [vmem:[#allocation2 + $0x2f8] sm:$0xff]
    %v1004 = vld [vmem:[#allocation2 + $0x300] sm:$0xff]
    %v1005 = vld [vmem:[#allocation2 + $0x308] sm:$0xff]
    %v1006 = vld [vmem:[#allocation2 + $0x310] sm:$0xff]
    %v1007 = vld [vmem:[#allocation2 + $0x318] sm:$0xff]
    %v1008 = vld [vmem:[#allocation2 + $0x320] sm:$0xff]
    %v1009 = vld [vmem:[#allocation2 + $0x328] sm:$0xff]
    %v1010 = vld [vmem:[#allocation2 + $0x330] sm:$0xff]
    %v1011 = vld [vmem:[#allocation2 + $0x338] sm:$0xff]
    %v1012 = vld [vmem:[#allocation2 + $0x340] sm:$0xff]
    %v1013 = vld [vmem:[#allocation2 + $0x348] sm:$0xff]
    %v1014 = vld [vmem:[#allocation2 + $0x350] sm:$0xff]
    %v1015 = vld [vmem:[#allocation2 + $0x358] sm:$0xff]
    %v1016 = vld [vmem:[#allocation2 + $0x360] sm:$0xff]
    %v1017 = vld [vmem:[#allocation2 + $0x368] sm:$0xff]
    %v1018 = vld [vmem:[#allocation2 + $0x370] sm:$0xff]
    %v1019 = vld [vmem:[#allocation2 + $0x378] sm:$0xff]
    %v1020 = vld [vmem:[#allocation2 + $0x380] sm:$0xff]
    %v1021 = vld [vmem:[#allocation2 + $0x388] sm:$0xff]
    %v1022 = vld [vmem:[#allocation2 + $0x390] sm:$0xff]
    %v1023 = vld [vmem:[#allocation2 + $0x398] sm:$0xff]
    %v1024 = vld [vmem:[#allocation2 + $0x3a0] sm:$0xff]
    %v1025 = vld [vmem:[#allocation2 + $0x3a8] sm:$0xff]
    %v1026 = vld [vmem:[#allocation2 + $0x3b0] sm:$0xff]
    %v1027 = vld [vmem:[#allocation2 + $0x3b8] sm:$0xff]
    %v1028 = vld [vmem:[#allocation2 + $0x3c0] sm:$0xff]
    %v1029 = vld [vmem:[#allocation2 + $0x3c8] sm:$0xff]
    %v1030 = vld [vmem:[#allocation2 + $0x3d0] sm:$0xff]
    %v1031 = vld [vmem:[#allocation2 + $0x3d8] sm:$0xff]
    %v1032 = vld [vmem:[#allocation2 + $0x3e0] sm:$0xff]
    %v1033 = vld [vmem:[#allocation2 + $0x3e8] sm:$0xff]
    %v1034 = vld [vmem:[#allocation2 + $0x3f0] sm:$0xff]
    %v1035 = vld [vmem:[#allocation2 + $0x3f8] sm:$0xff]
    %v1036 = vunpack.c.l.bf16 %v908
    %v1037 = vunpack.c.l.bf16 %v909
    %v1038 = vunpack.c.h.bf16 %v908
    %v1039 = vunpack.c.h.bf16 %v909
    %v1040 = vunpack.c.l.bf16 %v910
    %v1041 = vunpack.c.l.bf16 %v911
    %v1042 = vunpack.c.h.bf16 %v910
    %v1043 = vunpack.c.h.bf16 %v911
    %v1044 = vunpack.c.l.bf16 %v912
    %v1045 = vunpack.c.l.bf16 %v913
    %v1046 = vunpack.c.h.bf16 %v912
    %v1047 = vunpack.c.h.bf16 %v913
    %v1048 = vunpack.c.l.bf16 %v914
    %v1049 = vunpack.c.l.bf16 %v915
    %v1050 = vunpack.c.h.bf16 %v914
    %v1051 = vunpack.c.h.bf16 %v915
    %v1052 = vunpack.c.l.bf16 %v916
    %v1053 = vunpack.c.l.bf16 %v917
    %v1054 = vunpack.c.h.bf16 %v916
    %v1055 = vunpack.c.h.bf16 %v917
    %v1056 = vunpack.c.l.bf16 %v918
    %v1057 = vunpack.c.l.bf16 %v919
    %v1058 = vunpack.c.h.bf16 %v918
    %v1059 = vunpack.c.h.bf16 %v919
    %v1060 = vunpack.c.l.bf16 %v920
    %v1061 = vunpack.c.l.bf16 %v921
    %v1062 = vunpack.c.h.bf16 %v920
    %v1063 = vunpack.c.h.bf16 %v921
    %v1064 = vunpack.c.l.bf16 %v922
    %v1065 = vunpack.c.l.bf16 %v923
    %v1066 = vunpack.c.h.bf16 %v922
    %v1067 = vunpack.c.h.bf16 %v923
    %v1068 = vunpack.c.l.bf16 %v924
    %v1069 = vunpack.c.l.bf16 %v925
    %v1070 = vunpack.c.h.bf16 %v924
    %v1071 = vunpack.c.h.bf16 %v925
    %v1072 = vunpack.c.l.bf16 %v926
    %v1073 = vunpack.c.l.bf16 %v927
    %v1074 = vunpack.c.h.bf16 %v926
    %v1075 = vunpack.c.h.bf16 %v927
    %v1076 = vunpack.c.l.bf16 %v928
    %v1077 = vunpack.c.l.bf16 %v929
    %v1078 = vunpack.c.h.bf16 %v928
    %v1079 = vunpack.c.h.bf16 %v929
    %v1080 = vunpack.c.l.bf16 %v930
    %v1081 = vunpack.c.l.bf16 %v931
    %v1082 = vunpack.c.h.bf16 %v930
    %v1083 = vunpack.c.h.bf16 %v931
    %v1084 = vunpack.c.l.bf16 %v932
    %v1085 = vunpack.c.l.bf16 %v933
    %v1086 = vunpack.c.h.bf16 %v932
    %v1087 = vunpack.c.h.bf16 %v933
    %v1088 = vunpack.c.l.bf16 %v934
    %v1089 = vunpack.c.l.bf16 %v935
    %v1090 = vunpack.c.h.bf16 %v934
    %v1091 = vunpack.c.h.bf16 %v935
    %v1092 = vunpack.c.l.bf16 %v936
    %v1093 = vunpack.c.l.bf16 %v937
    %v1094 = vunpack.c.h.bf16 %v936
    %v1095 = vunpack.c.h.bf16 %v937
    %v1096 = vunpack.c.l.bf16 %v938
    %v1097 = vunpack.c.l.bf16 %v939
    %v1098 = vunpack.c.h.bf16 %v938
    %v1099 = vunpack.c.h.bf16 %v939
    %v1100 = vunpack.c.l.bf16 %v940
    %v1101 = vunpack.c.l.bf16 %v941
    %v1102 = vunpack.c.h.bf16 %v940
    %v1103 = vunpack.c.h.bf16 %v941
    %v1104 = vunpack.c.l.bf16 %v942
    %v1105 = vunpack.c.l.bf16 %v943
    %v1106 = vunpack.c.h.bf16 %v942
    %v1107 = vunpack.c.h.bf16 %v943
    %v1108 = vunpack.c.l.bf16 %v944
    %v1109 = vunpack.c.l.bf16 %v945
    %v1110 = vunpack.c.h.bf16 %v944
    %v1111 = vunpack.c.h.bf16 %v945
    %v1112 = vunpack.c.l.bf16 %v946
    %v1113 = vunpack.c.l.bf16 %v947
    %v1114 = vunpack.c.h.bf16 %v946
    %v1115 = vunpack.c.h.bf16 %v947
    %v1116 = vunpack.c.l.bf16 %v948
    %v1117 = vunpack.c.l.bf16 %v949
    %v1118 = vunpack.c.h.bf16 %v948
    %v1119 = vunpack.c.h.bf16 %v949
    %v1120 = vunpack.c.l.bf16 %v950
    %v1121 = vunpack.c.l.bf16 %v951
    %v1122 = vunpack.c.h.bf16 %v950
    %v1123 = vunpack.c.h.bf16 %v951
    %v1124 = vunpack.c.l.bf16 %v952
    %v1125 = vunpack.c.l.bf16 %v953
    %v1126 = vunpack.c.h.bf16 %v952
    %v1127 = vunpack.c.h.bf16 %v953
    %v1128 = vunpack.c.l.bf16 %v954
    %v1129 = vunpack.c.l.bf16 %v955
    %v1130 = vunpack.c.h.bf16 %v954
    %v1131 = vunpack.c.h.bf16 %v955
    %v1132 = vunpack.c.l.bf16 %v956
    %v1133 = vunpack.c.l.bf16 %v957
    %v1134 = vunpack.c.h.bf16 %v956
    %v1135 = vunpack.c.h.bf16 %v957
    %v1136 = vunpack.c.l.bf16 %v958
    %v1137 = vunpack.c.l.bf16 %v959
    %v1138 = vunpack.c.h.bf16 %v958
    %v1139 = vunpack.c.h.bf16 %v959
    %v1140 = vunpack.c.l.bf16 %v960
    %v1141 = vunpack.c.l.bf16 %v961
    %v1142 = vunpack.c.h.bf16 %v960
    %v1143 = vunpack.c.h.bf16 %v961
    %v1144 = vunpack.c.l.bf16 %v962
    %v1145 = vunpack.c.l.bf16 %v963
    %v1146 = vunpack.c.h.bf16 %v962
    %v1147 = vunpack.c.h.bf16 %v963
    %v1148 = vunpack.c.l.bf16 %v964
    %v1149 = vunpack.c.l.bf16 %v965
    %v1150 = vunpack.c.h.bf16 %v964
    %v1151 = vunpack.c.h.bf16 %v965
    %v1152 = vunpack.c.l.bf16 %v966
    %v1153 = vunpack.c.l.bf16 %v967
    %v1154 = vunpack.c.h.bf16 %v966
    %v1155 = vunpack.c.h.bf16 %v967
    %v1156 = vunpack.c.l.bf16 %v968
    %v1157 = vunpack.c.l.bf16 %v969
    %v1158 = vunpack.c.h.bf16 %v968
    %v1159 = vunpack.c.h.bf16 %v969
    %v1160 = vunpack.c.l.bf16 %v970
    %v1161 = vunpack.c.l.bf16 %v971
    %v1162 = vunpack.c.h.bf16 %v970
    %v1163 = vunpack.c.h.bf16 %v971
    %v1164 = vunpack.c.l.bf16 %v972
    %v1165 = vunpack.c.l.bf16 %v973
    %v1166 = vunpack.c.h.bf16 %v972
    %v1167 = vunpack.c.h.bf16 %v973
    %v1168 = vunpack.c.l.bf16 %v974
    %v1169 = vunpack.c.l.bf16 %v975
    %v1170 = vunpack.c.h.bf16 %v974
    %v1171 = vunpack.c.h.bf16 %v975
    %v1172 = vunpack.c.l.bf16 %v976
    %v1173 = vunpack.c.l.bf16 %v977
    %v1174 = vunpack.c.h.bf16 %v976
    %v1175 = vunpack.c.h.bf16 %v977
    %v1176 = vunpack.c.l.bf16 %v978
    %v1177 = vunpack.c.l.bf16 %v979
    %v1178 = vunpack.c.h.bf16 %v978
    %v1179 = vunpack.c.h.bf16 %v979
    %v1180 = vunpack.c.l.bf16 %v980
    %v1181 = vunpack.c.l.bf16 %v981
    %v1182 = vunpack.c.h.bf16 %v980
    %v1183 = vunpack.c.h.bf16 %v981
    %v1184 = vunpack.c.l.bf16 %v982
    %v1185 = vunpack.c.l.bf16 %v983
    %v1186 = vunpack.c.h.bf16 %v982
    %v1187 = vunpack.c.h.bf16 %v983
    %v1188 = vunpack.c.l.bf16 %v984
    %v1189 = vunpack.c.l.bf16 %v985
    %v1190 = vunpack.c.h.bf16 %v984
    %v1191 = vunpack.c.h.bf16 %v985
    %v1192 = vunpack.c.l.bf16 %v986
    %v1193 = vunpack.c.l.bf16 %v987
    %v1194 = vunpack.c.h.bf16 %v986
    %v1195 = vunpack.c.h.bf16 %v987
    %v1196 = vunpack.c.l.bf16 %v988
    %v1197 = vunpack.c.l.bf16 %v989
    %v1198 = vunpack.c.h.bf16 %v988
    %v1199 = vunpack.c.h.bf16 %v989
    %v1200 = vunpack.c.l.bf16 %v990
    %v1201 = vunpack.c.l.bf16 %v991
    %v1202 = vunpack.c.h.bf16 %v990
    %v1203 = vunpack.c.h.bf16 %v991
    %v1204 = vunpack.c.l.bf16 %v992
    %v1205 = vunpack.c.l.bf16 %v993
    %v1206 = vunpack.c.h.bf16 %v992
    %v1207 = vunpack.c.h.bf16 %v993
    %v1208 = vunpack.c.l.bf16 %v994
    %v1209 = vunpack.c.l.bf16 %v995
    %v1210 = vunpack.c.h.bf16 %v994
    %v1211 = vunpack.c.h.bf16 %v995
    %v1212 = vunpack.c.l.bf16 %v996
    %v1213 = vunpack.c.l.bf16 %v997
    %v1214 = vunpack.c.h.bf16 %v996
    %v1215 = vunpack.c.h.bf16 %v997
    %v1216 = vunpack.c.l.bf16 %v998
    %v1217 = vunpack.c.l.bf16 %v999
    %v1218 = vunpack.c.h.bf16 %v998
    %v1219 = vunpack.c.h.bf16 %v999
    %v1220 = vunpack.c.l.bf16 %v1000
    %v1221 = vunpack.c.l.bf16 %v1001
    %v1222 = vunpack.c.h.bf16 %v1000
    %v1223 = vunpack.c.h.bf16 %v1001
    %v1224 = vunpack.c.l.bf16 %v1002
    %v1225 = vunpack.c.l.bf16 %v1003
    %v1226 = vunpack.c.h.bf16 %v1002
    %v1227 = vunpack.c.h.bf16 %v1003
    %v1228 = vunpack.c.l.bf16 %v1004
    %v1229 = vunpack.c.l.bf16 %v1005
    %v1230 = vunpack.c.h.bf16 %v1004
    %v1231 = vunpack.c.h.bf16 %v1005
    %v1232 = vunpack.c.l.bf16 %v1006
    %v1233 = vunpack.c.l.bf16 %v1007
    %v1234 = vunpack.c.h.bf16 %v1006
    %v1235 = vunpack.c.h.bf16 %v1007
    %v1236 = vunpack.c.l.bf16 %v1008
    %v1237 = vunpack.c.l.bf16 %v1009
    %v1238 = vunpack.c.h.bf16 %v1008
    %v1239 = vunpack.c.h.bf16 %v1009
    %v1240 = vunpack.c.l.bf16 %v1010
    %v1241 = vunpack.c.l.bf16 %v1011
    %v1242 = vunpack.c.h.bf16 %v1010
    %v1243 = vunpack.c.h.bf16 %v1011
    %v1244 = vunpack.c.l.bf16 %v1012
    %v1245 = vunpack.c.l.bf16 %v1013
    %v1246 = vunpack.c.h.bf16 %v1012
    %v1247 = vunpack.c.h.bf16 %v1013
    %v1248 = vunpack.c.l.bf16 %v1014
    %v1249 = vunpack.c.l.bf16 %v1015
    %v1250 = vunpack.c.h.bf16 %v1014
    %v1251 = vunpack.c.h.bf16 %v1015
    %v1252 = vunpack.c.l.bf16 %v1016
    %v1253 = vunpack.c.l.bf16 %v1017
    %v1254 = vunpack.c.h.bf16 %v1016
    %v1255 = vunpack.c.h.bf16 %v1017
    %v1256 = vunpack.c.l.bf16 %v1018
    %v1257 = vunpack.c.l.bf16 %v1019
    %v1258 = vunpack.c.h.bf16 %v1018
    %v1259 = vunpack.c.h.bf16 %v1019
    %v1260 = vunpack.c.l.bf16 %v1020
    %v1261 = vunpack.c.l.bf16 %v1021
    %v1262 = vunpack.c.h.bf16 %v1020
    %v1263 = vunpack.c.h.bf16 %v1021
    %v1264 = vunpack.c.l.bf16 %v1022
    %v1265 = vunpack.c.l.bf16 %v1023
    %v1266 = vunpack.c.h.bf16 %v1022
    %v1267 = vunpack.c.h.bf16 %v1023
    %v1268 = vunpack.c.l.bf16 %v1024
    %v1269 = vunpack.c.l.bf16 %v1025
    %v1270 = vunpack.c.h.bf16 %v1024
    %v1271 = vunpack.c.h.bf16 %v1025
    %v1272 = vunpack.c.l.bf16 %v1026
    %v1273 = vunpack.c.l.bf16 %v1027
    %v1274 = vunpack.c.h.bf16 %v1026
    %v1275 = vunpack.c.h.bf16 %v1027
    %v1276 = vunpack.c.l.bf16 %v1028
    %v1277 = vunpack.c.l.bf16 %v1029
    %v1278 = vunpack.c.h.bf16 %v1028
    %v1279 = vunpack.c.h.bf16 %v1029
    %v1280 = vunpack.c.l.bf16 %v1030
    %v1281 = vunpack.c.l.bf16 %v1031
    %v1282 = vunpack.c.h.bf16 %v1030
    %v1283 = vunpack.c.h.bf16 %v1031
    %v1284 = vunpack.c.l.bf16 %v1032
    %v1285 = vunpack.c.l.bf16 %v1033
    %v1286 = vunpack.c.h.bf16 %v1032
    %v1287 = vunpack.c.h.bf16 %v1033
    %v1288 = vunpack.c.l.bf16 %v1034
    %v1289 = vunpack.c.l.bf16 %v1035
    %v1290 = vunpack.c.h.bf16 %v1034
    %v1291 = vunpack.c.h.bf16 %v1035
    %v1292 = vld [vmem:[%s7] sm:$0x3]
    %v1294 = vlaneseq
    %v1295 = vshrl.u32 %v1294, 7
    %v1296 = vsub.s32 0, %v1295
    %v1297 = vrot.slane %v1292, %v1296
    %v1298 = vlaneseq
    %v1299 = vshrl.u32 %v1298, 7
    %v1300 = vsub.s32 1, %v1299
    %v1301 = vrot.slane %v1292, %v1300
    %1304 = vmatprep.subr.mxu0 %v1037
    %1305 = vmatpush1.msra.mxu0 %v1036
    %1306 = vmatprep.subr.mxu0 %v1039
    %1307 = vmatpush1.msra.mxu0 %v1038
    %1308 = vmatprep.subr.mxu0 %v1041
    %1309 = vmatpush1.msra.mxu0 %v1040
    %1310 = vmatprep.subr.mxu0 %v1043
    %1311 = vmatpush1.msra.mxu0 %v1042
    %1312 = vmatprep.subr.mxu0 %v1045
    %1313 = vmatpush1.msra.mxu0 %v1044
    %1314 = vmatprep.subr.mxu0 %v1047
    %1315 = vmatpush1.msra.mxu0 %v1046
    %1316 = vmatprep.subr.mxu0 %v1049
    %1317 = vmatpush1.msra.mxu0 %v1048
    %1318 = vmatprep.subr.mxu0 %v1051
    %1319 = vmatpush1.msra.mxu0 %v1050
    %1320 = vmatprep.subr.mxu0 %v1053
    %1321 = vmatpush1.msra.mxu0 %v1052
    %1322 = vmatprep.subr.mxu0 %v1055
    %1323 = vmatpush1.msra.mxu0 %v1054
    %1324 = vmatprep.subr.mxu0 %v1057
    %1325 = vmatpush1.msra.mxu0 %v1056
    %1326 = vmatprep.subr.mxu0 %v1059
    %1327 = vmatpush1.msra.mxu0 %v1058
    %1328 = vmatprep.subr.mxu0 %v1061
    %1329 = vmatpush1.msra.mxu0 %v1060
    %1330 = vmatprep.subr.mxu0 %v1063
    %1331 = vmatpush1.msra.mxu0 %v1062
    %1332 = vmatprep.subr.mxu0 %v1065
    %1333 = vmatpush1.msra.mxu0 %v1064
    %1334 = vmatprep.subr.mxu0 %v1067
    %1335 = vmatpush1.msra.mxu0 %v1066
    %1336 = vmatprep.subr.mxu0 %v1069
    %1337 = vmatpush1.msra.mxu0 %v1068
    %1338 = vmatprep.subr.mxu0 %v1071
    %1339 = vmatpush1.msra.mxu0 %v1070
    %1340 = vmatprep.subr.mxu0 %v1073
    %1341 = vmatpush1.msra.mxu0 %v1072
    %1342 = vmatprep.subr.mxu0 %v1075
    %1343 = vmatpush1.msra.mxu0 %v1074
    %1344 = vmatprep.subr.mxu0 %v1077
    %1345 = vmatpush1.msra.mxu0 %v1076
    %1346 = vmatprep.subr.mxu0 %v1079
    %1347 = vmatpush1.msra.mxu0 %v1078
    %1348 = vmatprep.subr.mxu0 %v1081
    %1349 = vmatpush1.msra.mxu0 %v1080
    %1350 = vmatprep.subr.mxu0 %v1083
    %1351 = vmatpush1.msra.mxu0 %v1082
    %1352 = vmatprep.subr.mxu0 %v1085
    %1353 = vmatpush1.msra.mxu0 %v1084
    %1354 = vmatprep.subr.mxu0 %v1087
    %1355 = vmatpush1.msra.mxu0 %v1086
    %1356 = vmatprep.subr.mxu0 %v1089
    %1357 = vmatpush1.msra.mxu0 %v1088
    %1358 = vmatprep.subr.mxu0 %v1091
    %1359 = vmatpush1.msra.mxu0 %v1090
    %1360 = vmatprep.subr.mxu0 %v1093
    %1361 = vmatpush1.msra.mxu0 %v1092
    %1362 = vmatprep.subr.mxu0 %v1095
    %1363 = vmatpush1.msra.mxu0 %v1094
    %1364 = vmatprep.subr.mxu0 %v1097
    %1365 = vmatpush1.msra.mxu0 %v1096
    %1366 = vmatprep.subr.mxu0 %v1099
    %1367 = vmatpush1.msra.mxu0 %v1098
    %1368 = vmatprep.mubr.f32.mxu0 %v871
    %1369 = vmatmul.mubr.f32.gmra.mrb[0].mxu0 %v866
    %v1370 = vpop.f32.mrb[0].mxu0
    %v1371 = vadd.f32 %v1297, %v1370
    %v1372 = vpop.f32.mrb[0].mxu0
    %v1373 = vadd.f32 %v1301, %v1372
    %1374 = vdwg.mxu0
    %1375 = vmatprep.subr.mxu0 %v1101
    %1376 = vmatpush1.msra.mxu0 %v1100
    %1377 = vmatprep.subr.mxu0 %v1103
    %1378 = vmatpush1.msra.mxu0 %v1102
    %1379 = vmatprep.subr.mxu0 %v1105
    %1380 = vmatpush1.msra.mxu0 %v1104
    %1381 = vmatprep.subr.mxu0 %v1107
    %1382 = vmatpush1.msra.mxu0 %v1106
    %1383 = vmatprep.subr.mxu0 %v1109
    %1384 = vmatpush1.msra.mxu0 %v1108
    %1385 = vmatprep.subr.mxu0 %v1111
    %1386 = vmatpush1.msra.mxu0 %v1110
    %1387 = vmatprep.subr.mxu0 %v1113
    %1388 = vmatpush1.msra.mxu0 %v1112
    %1389 = vmatprep.subr.mxu0 %v1115
    %1390 = vmatpush1.msra.mxu0 %v1114
    %1391 = vmatprep.subr.mxu0 %v1117
    %1392 = vmatpush1.msra.mxu0 %v1116
    %1393 = vmatprep.subr.mxu0 %v1119
    %1394 = vmatpush1.msra.mxu0 %v1118
    %1395 = vmatprep.subr.mxu0 %v1121
    %1396 = vmatpush1.msra.mxu0 %v1120
    %1397 = vmatprep.subr.mxu0 %v1123
    %1398 = vmatpush1.msra.mxu0 %v1122
    %1399 = vmatprep.subr.mxu0 %v1125
    %1400 = vmatpush1.msra.mxu0 %v1124
    %1401 = vmatprep.subr.mxu0 %v1127
    %1402 = vmatpush1.msra.mxu0 %v1126
    %1403 = vmatprep.subr.mxu0 %v1129
    %1404 = vmatpush1.msra.mxu0 %v1128
    %1405 = vmatprep.subr.mxu0 %v1131
    %1406 = vmatpush1.msra.mxu0 %v1130
    %1407 = vmatprep.subr.mxu0 %v1133
    %1408 = vmatpush1.msra.mxu0 %v1132
    %1409 = vmatprep.subr.mxu0 %v1135
    %1410 = vmatpush1.msra.mxu0 %v1134
    %1411 = vmatprep.subr.mxu0 %v1137
    %1412 = vmatpush1.msra.mxu0 %v1136
    %1413 = vmatprep.subr.mxu0 %v1139
    %1414 = vmatpush1.msra.mxu0 %v1138
    %1415 = vmatprep.subr.mxu0 %v1141
    %1416 = vmatpush1.msra.mxu0 %v1140
    %1417 = vmatprep.subr.mxu0 %v1143
    %1418 = vmatpush1.msra.mxu0 %v1142
    %1419 = vmatprep.subr.mxu0 %v1145
    %1420 = vmatpush1.msra.mxu0 %v1144
    %1421 = vmatprep.subr.mxu0 %v1147
    %1422 = vmatpush1.msra.mxu0 %v1146
    %1423 = vmatprep.subr.mxu0 %v1149
    %1424 = vmatpush1.msra.mxu0 %v1148
    %1425 = vmatprep.subr.mxu0 %v1151
    %1426 = vmatpush1.msra.mxu0 %v1150
    %1427 = vmatprep.subr.mxu0 %v1153
    %1428 = vmatpush1.msra.mxu0 %v1152
    %1429 = vmatprep.subr.mxu0 %v1155
    %1430 = vmatpush1.msra.mxu0 %v1154
    %1431 = vmatprep.subr.mxu0 %v1157
    %1432 = vmatpush1.msra.mxu0 %v1156
    %1433 = vmatprep.subr.mxu0 %v1159
    %1434 = vmatpush1.msra.mxu0 %v1158
    %1435 = vmatprep.subr.mxu0 %v1161
    %1436 = vmatpush1.msra.mxu0 %v1160
    %1437 = vmatprep.subr.mxu0 %v1163
    %1438 = vmatpush1.msra.mxu0 %v1162
    %1439 = vmatprep.mubr.f32.mxu0 %v881
    %1440 = vmatmul.mubr.f32.gmra.mrb[0].mxu0 %v876
    %v1441 = vpop.f32.mrb[0].mxu0
    %v1442 = vadd.f32 %v1371, %v1441
    %v1443 = vpop.f32.mrb[0].mxu0
    %v1444 = vadd.f32 %v1373, %v1443
    %1445 = vdwg.mxu0
    %1446 = vmatprep.subr.mxu0 %v1165
    %1447 = vmatpush1.msra.mxu0 %v1164
    %1448 = vmatprep.subr.mxu0 %v1167
    %1449 = vmatpush1.msra.mxu0 %v1166
    %1450 = vmatprep.subr.mxu0 %v1169
    %1451 = vmatpush1.msra.mxu0 %v1168
    %1452 = vmatprep.subr.mxu0 %v1171
    %1453 = vmatpush1.msra.mxu0 %v1170
    %1454 = vmatprep.subr.mxu0 %v1173
    %1455 = vmatpush1.msra.mxu0 %v1172
    %1456 = vmatprep.subr.mxu0 %v1175
    %1457 = vmatpush1.msra.mxu0 %v1174
    %1458 = vmatprep.subr.mxu0 %v1177
    %1459 = vmatpush1.msra.mxu0 %v1176
    %1460 = vmatprep.subr.mxu0 %v1179
    %1461 = vmatpush1.msra.mxu0 %v1178
    %1462 = vmatprep.subr.mxu0 %v1181
    %1463 = vmatpush1.msra.mxu0 %v1180
    %1464 = vmatprep.subr.mxu0 %v1183
    %1465 = vmatpush1.msra.mxu0 %v1182
    %1466 = vmatprep.subr.mxu0 %v1185
    %1467 = vmatpush1.msra.mxu0 %v1184
    %1468 = vmatprep.subr.mxu0 %v1187
    %1469 = vmatpush1.msra.mxu0 %v1186
    %1470 = vmatprep.subr.mxu0 %v1189
    %1471 = vmatpush1.msra.mxu0 %v1188
    %1472 = vmatprep.subr.mxu0 %v1191
    %1473 = vmatpush1.msra.mxu0 %v1190
    %1474 = vmatprep.subr.mxu0 %v1193
    %1475 = vmatpush1.msra.mxu0 %v1192
    %1476 = vmatprep.subr.mxu0 %v1195
    %1477 = vmatpush1.msra.mxu0 %v1194
    %1478 = vmatprep.subr.mxu0 %v1197
    %1479 = vmatpush1.msra.mxu0 %v1196
    %1480 = vmatprep.subr.mxu0 %v1199
    %1481 = vmatpush1.msra.mxu0 %v1198
    %1482 = vmatprep.subr.mxu0 %v1201
    %1483 = vmatpush1.msra.mxu0 %v1200
    %1484 = vmatprep.subr.mxu0 %v1203
    %1485 = vmatpush1.msra.mxu0 %v1202
    %1486 = vmatprep.subr.mxu0 %v1205
    %1487 = vmatpush1.msra.mxu0 %v1204
    %1488 = vmatprep.subr.mxu0 %v1207
    %1489 = vmatpush1.msra.mxu0 %v1206
    %1490 = vmatprep.subr.mxu0 %v1209
    %1491 = vmatpush1.msra.mxu0 %v1208
    %1492 = vmatprep.subr.mxu0 %v1211
    %1493 = vmatpush1.msra.mxu0 %v1210
    %1494 = vmatprep.subr.mxu0 %v1213
    %1495 = vmatpush1.msra.mxu0 %v1212
    %1496 = vmatprep.subr.mxu0 %v1215
    %1497 = vmatpush1.msra.mxu0 %v1214
    %1498 = vmatprep.subr.mxu0 %v1217
    %1499 = vmatpush1.msra.mxu0 %v1216
    %1500 = vmatprep.subr.mxu0 %v1219
    %1501 = vmatpush1.msra.mxu0 %v1218
    %1502 = vmatprep.subr.mxu0 %v1221
    %1503 = vmatpush1.msra.mxu0 %v1220
    %1504 = vmatprep.subr.mxu0 %v1223
    %1505 = vmatpush1.msra.mxu0 %v1222
    %1506 = vmatprep.subr.mxu0 %v1225
    %1507 = vmatpush1.msra.mxu0 %v1224
    %1508 = vmatprep.subr.mxu0 %v1227
    %1509 = vmatpush1.msra.mxu0 %v1226
    %1510 = vmatprep.mubr.f32.mxu0 %v891
    %1511 = vmatmul.mubr.f32.gmra.mrb[0].mxu0 %v886
    %v1512 = vpop.f32.mrb[0].mxu0
    %v1513 = vadd.f32 %v1442, %v1512
    %v1514 = vpop.f32.mrb[0].mxu0
    %v1515 = vadd.f32 %v1444, %v1514
    %1516 = vdwg.mxu0
    %1517 = vmatprep.subr.mxu0 %v1229
    %1518 = vmatpush1.msra.mxu0 %v1228
    %1519 = vmatprep.subr.mxu0 %v1231
    %1520 = vmatpush1.msra.mxu0 %v1230
    %1521 = vmatprep.subr.mxu0 %v1233
    %1522 = vmatpush1.msra.mxu0 %v1232
    %1523 = vmatprep.subr.mxu0 %v1235
    %1524 = vmatpush1.msra.mxu0 %v1234
    %1525 = vmatprep.subr.mxu0 %v1237
    %1526 = vmatpush1.msra.mxu0 %v1236
    %1527 = vmatprep.subr.mxu0 %v1239
    %1528 = vmatpush1.msra.mxu0 %v1238
    %1529 = vmatprep.subr.mxu0 %v1241
    %1530 = vmatpush1.msra.mxu0 %v1240
    %1531 = vmatprep.subr.mxu0 %v1243
    %1532 = vmatpush1.msra.mxu0 %v1242
    %1533 = vmatprep.subr.mxu0 %v1245
    %1534 = vmatpush1.msra.mxu0 %v1244
    %1535 = vmatprep.subr.mxu0 %v1247
    %1536 = vmatpush1.msra.mxu0 %v1246
    %1537 = vmatprep.subr.mxu0 %v1249
    %1538 = vmatpush1.msra.mxu0 %v1248
    %1539 = vmatprep.subr.mxu0 %v1251
    %1540 = vmatpush1.msra.mxu0 %v1250
    %1541 = vmatprep.subr.mxu0 %v1253
    %1542 = vmatpush1.msra.mxu0 %v1252
    %1543 = vmatprep.subr.mxu0 %v1255
    %1544 = vmatpush1.msra.mxu0 %v1254
    %1545 = vmatprep.subr.mxu0 %v1257
    %1546 = vmatpush1.msra.mxu0 %v1256
    %1547 = vmatprep.subr.mxu0 %v1259
    %1548 = vmatpush1.msra.mxu0 %v1258
    %1549 = vmatprep.subr.mxu0 %v1261
    %1550 = vmatpush1.msra.mxu0 %v1260
    %1551 = vmatprep.subr.mxu0 %v1263
    %1552 = vmatpush1.msra.mxu0 %v1262
    %1553 = vmatprep.subr.mxu0 %v1265
    %1554 = vmatpush1.msra.mxu0 %v1264
    %1555 = vmatprep.subr.mxu0 %v1267
    %1556 = vmatpush1.msra.mxu0 %v1266
    %1557 = vmatprep.subr.mxu0 %v1269
    %1558 = vmatpush1.msra.mxu0 %v1268
    %1559 = vmatprep.subr.mxu0 %v1271
    %1560 = vmatpush1.msra.mxu0 %v1270
    %1561 = vmatprep.subr.mxu0 %v1273
    %1562 = vmatpush1.msra.mxu0 %v1272
    %1563 = vmatprep.subr.mxu0 %v1275
    %1564 = vmatpush1.msra.mxu0 %v1274
    %1565 = vmatprep.subr.mxu0 %v1277
    %1566 = vmatpush1.msra.mxu0 %v1276
    %1567 = vmatprep.subr.mxu0 %v1279
    %1568 = vmatpush1.msra.mxu0 %v1278
    %1569 = vmatprep.subr.mxu0 %v1281
    %1570 = vmatpush1.msra.mxu0 %v1280
    %1571 = vmatprep.subr.mxu0 %v1283
    %1572 = vmatpush1.msra.mxu0 %v1282
    %1573 = vmatprep.subr.mxu0 %v1285
    %1574 = vmatpush1.msra.mxu0 %v1284
    %1575 = vmatprep.subr.mxu0 %v1287
    %1576 = vmatpush1.msra.mxu0 %v1286
    %1577 = vmatprep.subr.mxu0 %v1289
    %1578 = vmatpush1.msra.mxu0 %v1288
    %1579 = vmatprep.subr.mxu0 %v1291
    %1580 = vmatpush1.msra.mxu0 %v1290
    %1581 = vmatprep.mubr.f32.mxu0 %v901
    %1582 = vmatmul.mubr.f32.gmra.mrb[0].mxu0 %v896
    %v1583 = vpop.f32.mrb[0].mxu0
    %v1584 = vadd.f32 %v1513, %v1583
    %v1585 = vpop.f32.mrb[0].mxu0
    %v1586 = vadd.f32 %v1515, %v1585
    %1587 = vdwg.mxu0
    %vm1588 = vcmp.ge.f32.partialorder %v1584, 0.0
    %vm1589 = vcmp.ge.f32.partialorder %v1586, 0.0
    %v1590 = vmul.f32 %v1584, 0.01
    %v1591 = vmul.f32 %v1586, 0.01
    %v1592 = vsel %vm1588, %v1584, %v1590
    %v1593 = vsel %vm1589, %v1586, %v1591
    %v1594 = vld [vmem:[%s8] sm:$0xff]
    %v1595 = vld [vmem:[%s8 + $0x8] sm:$0xff]
    %v1596 = vld [vmem:[%s8 + $0x10] sm:$0xff]
    %v1597 = vld [vmem:[%s8 + $0x18] sm:$0xff]
    %v1598 = vld [vmem:[%s8 + $0x20] sm:$0xff]
    %v1599 = vld [vmem:[%s8 + $0x28] sm:$0xff]
    %v1600 = vld [vmem:[%s8 + $0x30] sm:$0xff]
    %v1601 = vld [vmem:[%s8 + $0x38] sm:$0xff]
    %v1602 = vld [vmem:[%s8 + $0x40] sm:$0xff]
    %v1603 = vld [vmem:[%s8 + $0x48] sm:$0xff]
    %v1604 = vld [vmem:[%s8 + $0x50] sm:$0xff]
    %v1605 = vld [vmem:[%s8 + $0x58] sm:$0xff]
    %v1606 = vld [vmem:[%s8 + $0x60] sm:$0xff]
    %v1607 = vld [vmem:[%s8 + $0x68] sm:$0xff]
    %v1608 = vld [vmem:[%s8 + $0x70] sm:$0xff]
    %v1609 = vld [vmem:[%s8 + $0x78] sm:$0xff]
    %v1610 = vld [vmem:[%s8 + $0x80] sm:$0xff]
    %v1611 = vld [vmem:[%s8 + $0x88] sm:$0xff]
    %v1612 = vld [vmem:[%s8 + $0x90] sm:$0xff]
    %v1613 = vld [vmem:[%s8 + $0x98] sm:$0xff]
    %v1614 = vld [vmem:[%s8 + $0xa0] sm:$0xff]
    %v1615 = vld [vmem:[%s8 + $0xa8] sm:$0xff]
    %v1616 = vld [vmem:[%s8 + $0xb0] sm:$0xff]
    %v1617 = vld [vmem:[%s8 + $0xb8] sm:$0xff]
    %v1618 = vld [vmem:[%s8 + $0xc0] sm:$0xff]
    %v1619 = vld [vmem:[%s8 + $0xc8] sm:$0xff]
    %v1620 = vld [vmem:[%s8 + $0xd0] sm:$0xff]
    %v1621 = vld [vmem:[%s8 + $0xd8] sm:$0xff]
    %v1622 = vld [vmem:[%s8 + $0xe0] sm:$0xff]
    %v1623 = vld [vmem:[%s8 + $0xe8] sm:$0xff]
    %v1624 = vld [vmem:[%s8 + $0xf0] sm:$0xff]
    %v1625 = vld [vmem:[%s8 + $0xf8] sm:$0xff]
    %v1626 = vld [vmem:[%s9] sm:$0x1]
    %v1628 = vlaneseq
    %v1629 = vshrl.u32 %v1628, 7
    %v1630 = vsub.s32 0, %v1629
    %v1631 = vrot.slane %v1626, %v1630
    %1633 = vmatprep.subr.mxu0 0.0
    %1634 = vmatpush1.msra.mxu0 %v1594
    %1635 = vmatprep.subr.mxu0 0.0
    %1636 = vmatpush1.msra.mxu0 %v1595
    %1637 = vmatprep.subr.mxu0 0.0
    %1638 = vmatpush1.msra.mxu0 %v1596
    %1639 = vmatprep.subr.mxu0 0.0
    %1640 = vmatpush1.msra.mxu0 %v1597
    %1641 = vmatprep.subr.mxu0 0.0
    %1642 = vmatpush1.msra.mxu0 %v1598
    %1643 = vmatprep.subr.mxu0 0.0
    %1644 = vmatpush1.msra.mxu0 %v1599
    %1645 = vmatprep.subr.mxu0 0.0
    %1646 = vmatpush1.msra.mxu0 %v1600
    %1647 = vmatprep.subr.mxu0 0.0
    %1648 = vmatpush1.msra.mxu0 %v1601
    %1649 = vmatprep.subr.mxu0 0.0
    %1650 = vmatpush1.msra.mxu0 %v1602
    %1651 = vmatprep.subr.mxu0 0.0
    %1652 = vmatpush1.msra.mxu0 %v1603
    %1653 = vmatprep.subr.mxu0 0.0
    %1654 = vmatpush1.msra.mxu0 %v1604
    %1655 = vmatprep.subr.mxu0 0.0
    %1656 = vmatpush1.msra.mxu0 %v1605
    %1657 = vmatprep.subr.mxu0 0.0
    %1658 = vmatpush1.msra.mxu0 %v1606
    %1659 = vmatprep.subr.mxu0 0.0
    %1660 = vmatpush1.msra.mxu0 %v1607
    %1661 = vmatprep.subr.mxu0 0.0
    %1662 = vmatpush1.msra.mxu0 %v1608
    %1663 = vmatprep.subr.mxu0 0.0
    %1664 = vmatpush1.msra.mxu0 %v1609
    %1665 = vmatprep.subr.mxu0 0.0
    %1666 = vmatpush1.msra.mxu0 %v1610
    %1667 = vmatprep.subr.mxu0 0.0
    %1668 = vmatpush1.msra.mxu0 %v1611
    %1669 = vmatprep.subr.mxu0 0.0
    %1670 = vmatpush1.msra.mxu0 %v1612
    %1671 = vmatprep.subr.mxu0 0.0
    %1672 = vmatpush1.msra.mxu0 %v1613
    %1673 = vmatprep.subr.mxu0 0.0
    %1674 = vmatpush1.msra.mxu0 %v1614
    %1675 = vmatprep.subr.mxu0 0.0
    %1676 = vmatpush1.msra.mxu0 %v1615
    %1677 = vmatprep.subr.mxu0 0.0
    %1678 = vmatpush1.msra.mxu0 %v1616
    %1679 = vmatprep.subr.mxu0 0.0
    %1680 = vmatpush1.msra.mxu0 %v1617
    %1681 = vmatprep.subr.mxu0 0.0
    %1682 = vmatpush1.msra.mxu0 %v1618
    %1683 = vmatprep.subr.mxu0 0.0
    %1684 = vmatpush1.msra.mxu0 %v1619
    %1685 = vmatprep.subr.mxu0 0.0
    %1686 = vmatpush1.msra.mxu0 %v1620
    %1687 = vmatprep.subr.mxu0 0.0
    %1688 = vmatpush1.msra.mxu0 %v1621
    %1689 = vmatprep.subr.mxu0 0.0
    %1690 = vmatpush1.msra.mxu0 %v1622
    %1691 = vmatprep.subr.mxu0 0.0
    %1692 = vmatpush1.msra.mxu0 %v1623
    %1693 = vmatprep.subr.mxu0 0.0
    %1694 = vmatpush1.msra.mxu0 %v1624
    %1695 = vmatprep.subr.mxu0 0.0
    %1696 = vmatpush1.msra.mxu0 %v1625
    %1697 = vmatprep.mubr.f32.mxu0 %v1593
    %1698 = vmatmul.mubr.f32.gmra.mrb[0].mxu0 %v1592
    %v1699 = vpop.f32.mrb[0].mxu0
    %v1700 = vadd.f32 %v1631, %v1699
    %v1701 = vpop.f32.mrb[0].mxu0
    %1702 = vdwg.mxu0
    %vm1703 = vcmask 31744
    %1704 = vst.msk [vmem:[%s10] sm:$0xff] %vm1703, %v1700
    // Predicated region
    $region38: #{frets_forward.1} parent=1 // pred_check
      _
    $region39: #{frets_forward.1} parent=1 // pred_check_branch
      %1706 = sbr.rel (0) target = $region41
    $region40: #{frets_forward.1} parent=1 // pred_region
      _
    $region41: #{frets_forward.1} parent=1 // pred_fallthru
      _
    // Predicated region
    $region42: #{frets_forward.1} parent=1 // pred_check
      _
    $region43: #{frets_forward.1} parent=1 // pred_check_branch
      %1708 = sbr.rel (0) target = $region45
    $region44: #{frets_forward.1} parent=1 // pred_region
      _
    $region45: #{frets_forward.1} parent=1 // pred_fallthru
      _
  %1709 = vsyncmov [#allocation3]
  %s1710 = vpop.sfrf %1709
  %p1711 = scmp.eq.s32.totalorder %s1710, 0
  %p1712 = pneg %p1711
  %1714 = shalt.err (%p1712)

</llo_original>
